<compile_context>
chip_gen: v6e
topology: v6e:2x2x1
jax: 0.10.0
libtpu: 0.0.40
codegen_flags: <defaults>
</compile_context>

<pallas_src>
import functools

import jax
import jax.numpy as jnp
import numpy as np
from jax import lax
from jax.experimental import pallas as pl
from jax.experimental.pallas import tpu as pltpu

DROP_PROB = 0.2  # nn.Dropout is identity at inference.
_LANES = 128


def _round_up(x, m):
    return (x + m - 1) // m * m


def _vmem_budget_bytes():
    """Per-generation VMEM limit: ~3/4 of physical, capped at 96 MiB.

    v5e/v6e (128 MiB physical) -> 96 MiB; v7x (64 MiB physical) -> 48 MiB.
    """
    try:
        cap = pltpu.get_tpu_info().vmem_capacity_bytes
    except Exception:  # pragma: no cover - conservative (v7x-sized) fallback
        cap = 64 * 1024 * 1024
    return int(min(cap * 3 // 4, 96 * 1024 * 1024))


def _pick_batch_block(batch, seq, n_lanes, embed, feat_pad, vmem_budget):
    """Pick the per-step batch block bt.

    Hard constraints (review "correctness_concerns"):
      * bt divides B (grid = B // bt)
      * BlockSpec (8,128) rule: bt % 8 == 0, or bt == B (full-dim blocks);
        this also makes bt*S a legal sublane block for the input.
      * per-step working set (y + double-buffered bf16 x + resident T) fits.
    Preferences: >= 2 grid steps when legal (v7x megacore), ~2048 rows/step.
    """
    rows_target = 2048

    def vmem_bytes(bt):
        y = bt * seq * n_lanes * 4               # f32 matmul/ReLU intermediate
        xin = 2 * bt * seq * embed * 2           # bf16 input, double-buffered
        wts = embed * n_lanes * 2 + n_lanes * 4  # resident T (bf16) + bias (f32)
        out = 2 * bt * feat_pad * 4 + bt * n_lanes * 4
        return y + xin + wts + out

    legal = [d for d in range(1, batch + 1)
             if batch % d == 0 and (d == batch or d % 8 == 0)]
    multi = [d for d in legal if d < batch]      # at least 2 grid steps
    pool = multi if multi else legal
    fitting = [d for d in pool if vmem_bytes(d) <= vmem_budget]
    if fitting:
        pref = [d for d in fitting if d * seq <= rows_target]
        return max(pref) if pref else min(fitting)
    return min(legal, key=vmem_bytes)


def _conv_toeplitz_segment(w, b, embed_dim):
    """Expand a (H, K) 1-D conv filter into a tightly packed Toeplitz block.

    Channel h occupies columns [h*J, (h+1)*J) with J = E-K+1 (exact width, no
    per-channel padding); only the segment tail is zero-padded to a lane
    multiple.  For a row x (E,):
        (x @ T + bias)[h*J + j] == corr1d(x, w[h])[j] + b[h]
    Padding columns evaluate to relu(0 + 0) = 0 and are never included in any
    per-channel max-pool slice.
    """
    H, K = w.shape
    J = embed_dim - K + 1
    seg = H * J
    seg_pad = _round_up(seg, _LANES)
    e = jnp.arange(embed_dim)[:, None]           # (E, 1)
    j = jnp.arange(J)[None, :]                   # (1, J)
    k = e - j                                    # (E, J)
    valid = (k >= 0) & (k < K)
    kc = jnp.clip(k, 0, K - 1)
    gathered = w[:, kc]                          # (H, E, J)
    T = jnp.where(valid[None, :, :], gathered, 0.0)
    T = jnp.transpose(T, (1, 0, 2)).reshape(embed_dim, seg)
    bias = jnp.broadcast_to(b[:, None], (H, J)).reshape(1, seg)
    T = jnp.pad(T, ((0, 0), (0, seg_pad - seg)))
    bias = jnp.pad(bias, ((0, 0), (0, seg_pad - seg)))
    return T.astype(jnp.float32), bias.astype(jnp.float32), J, seg_pad


def _cnn_feature_kernel(x_ref, t_ref, bias_ref, out_ref, *,
                        bt, seq_len, channel_slices, feat_pad):
    # One bf16 MXU matmul covers all three convolutions for bt batch elements:
    # (bt*S, E) bf16 @ (E, N) bf16 -> (bt*S, N) accumulated in f32.
    y = jnp.dot(x_ref[...], t_ref[...], preferred_element_type=jnp.float32)
    y = jnp.maximum(y + bias_ref[...], 0.0)              # f32 bias + ReLU

    # Global max-pool, restructured per the perf review:
    #   1) one reduce over the sequence axis (sublane reduce), then
    #   2) only 3*H exact-width lane reduces — one per (conv, channel).
    n = y.shape[1]
    ym = jnp.max(y.reshape(bt, seq_len, n), axis=1)       # (bt, N)

    lane_idx = lax.broadcasted_iota(jnp.int32, (bt, feat_pad), 1)  # hoisted
    feats = jnp.zeros((bt, feat_pad), jnp.float32)
    for fidx, (c0, width) in enumerate(channel_slices):
        m = jnp.max(ym[:, c0:c0 + width], axis=1, keepdims=True)   # (bt, 1)
        feats = jnp.where(lane_idx == fidx, m, feats)
    out_ref[...] = feats            # single lane-dense full-block store


def cnn_forward(x, params):
    (w1, b1), (w2, b2), (w3, b3), (wl, bl) = params
    B, S, E = x.shape
    H = w1.shape[0]
    conv_params = ((w1, b1), (w2, b2), (w3, b3))
    kernel_sizes = tuple(w.shape[1] for (w, _) in conv_params)
    assert E >= max(kernel_sizes), "embed_dim must be >= the largest conv kernel"

    # Host-side Toeplitz expansion (tiny, batch independent).
    t_blocks, bias_blocks, channel_slices = [], [], []
    off = 0
    for (w, b) in conv_params:
        T_i, bias_i, J, seg_pad = _conv_toeplitz_segment(w, b, E)
        t_blocks.append(T_i)
        bias_blocks.append(bias_i)
        channel_slices += [(off + h * J, J) for h in range(H)]
        off += seg_pad
    N = off
    T = jnp.concatenate(t_blocks, axis=1).astype(jnp.bfloat16)   # (E, N) bf16
    bias_row = jnp.concatenate(bias_blocks, axis=1)              # (1, N) f32

    feat_dim = 3 * H
    feat_pad = _round_up(feat_dim, _LANES)

    vmem_limit = _vmem_budget_bytes()
    bt = _pick_batch_block(B, S, N, E, feat_pad, int(vmem_limit * 0.6))
    grid = (B // bt,)
    # NOTE: a prime / non-8-divisible B falls back to bt == B (single grid
    # step); batch padding would be needed for very large such B.

    # bf16 activations; skip the cast if the caller already provides bf16.
    x_rows = x.reshape(B * S, E)
    if x_rows.dtype != jnp.bfloat16:
        x_rows = x_rows.astype(jnp.bfloat16)

    cost = pl.CostEstimate(
        flops=2 * B * S * E * N,
        transcendentals=0,
        bytes_accessed=2 * B * S * E + 2 * E * N + 4 * N + 4 * B * feat_pad)

    kernel = functools.partial(
        _cnn_feature_kernel, bt=bt, seq_len=S,
        channel_slices=tuple(channel_slices), feat_pad=feat_pad)

    feats = pl.pallas_call(
        kernel,
        out_shape=jax.ShapeDtypeStruct((B, feat_pad), jnp.float32),
        grid=grid,
        in_specs=[
            pl.BlockSpec((bt * S, E), lambda i: (i, 0)),   # activations
            pl.BlockSpec((E, N), lambda i: (0, 0)),        # Toeplitz weights (resident)
            pl.BlockSpec((1, N), lambda i: (0, 0)),        # bias row (resident)
        ],
        out_specs=pl.BlockSpec((bt, feat_pad), lambda i: (i, 0)),
        compiler_params=pltpu.CompilerParams(
            dimension_semantics=("parallel",),
            vmem_limit_bytes=vmem_limit),
        cost_estimate=cost,
    )(x_rows, T, bias_row)

    feats = feats[:, :feat_dim]
    # nn.Dropout is identity at inference.  The 3H -> C linear (C=4 lanes)
    # stays in XLA per the review (an in-kernel lane-narrow matmul is waste).
    return jnp.einsum("bf,cf->bc", feats, wl, precision="highest") + bl


def init_params(key, hidden_num, class_num):
    ks = jax.random.split(key, 8)

    def uniform(k, shape, bound):
        return jax.random.uniform(k, shape, jnp.float32, -bound, bound)

    def conv(kw, kb, K):
        bound = 1.0 / np.sqrt(K)          # fan_in = 1 * 1 * K
        return uniform(kw, (hidden_num, K), bound), uniform(kb, (hidden_num,), bound)

    w1, b1 = conv(ks[0], ks[1], 32)
    w2, b2 = conv(ks[2], ks[3], 64)
    w3, b3 = conv(ks[4], ks[5], 128)
    bound = 1.0 / np.sqrt(3 * hidden_num)
    wl = uniform(ks[6], (class_num, 3 * hidden_num), bound)
    bl = uniform(ks[7], (class_num,), bound)
    return (w1, b1), (w2, b2), (w3, b3), (wl, bl)


def _im2col(x, K):
    """Reference-only helper: (B, S, E) -> (B, S*(E-K+1), K) sliding windows."""
    B, S, E = x.shape
    J = E - K + 1
    idx = jnp.arange(J)[:, None] + jnp.arange(K)[None, :]        # (J, K)
    patches = x[:, :, idx]                                        # (B, S, J, K)
    return patches.reshape(B, S * J, K)


def reference_forward(x, params, conv_dtype=jnp.float32):
    """Pure-JAX reference. conv_dtype=bfloat16 mimics the MXU input rounding
    (products exact in f32, f32 accumulation) for a tight structural check."""
    (w1, b1), (w2, b2), (w3, b3), (wl, bl) = params

    def conv_pool(x, W, b):
        K = W.shape[1]
        xc = x.astype(conv_dtype).astype(jnp.float32)
        Wc = W.astype(conv_dtype).astype(jnp.float32)
        p = _im2col(xc, K)                                         # (B, S*J, K)
        out = jnp.einsum("bpk,hk->bph", p, Wc, precision="highest") + b
        out = jnp.maximum(out, 0.0)
        return out.max(axis=1)                                     # (B, H)

    feat = jnp.concatenate(
        [conv_pool(x, w1, b1), conv_pool(x, w2, b2), conv_pool(x, w3, b3)],
        axis=1)
    return jnp.einsum("bf,cf->bc", feat, wl, precision="highest") + bl


if __name__ == "__main__":
    B, S, E = 2, 8, 128      # batch, max_len, embed_dim (E >= 128 for conv3)
    hidden_num, class_num = 8, 4

    key = jax.random.PRNGKey(0)
    kx, kp = jax.random.split(key)
    x = jax.random.normal(kx, (B, S, E), dtype=jnp.float32)
    params = init_params(kp, hidden_num, class_num)

    out = jax.block_until_ready(cnn_forward(x, params))
    assert out.shape == (B, class_num), out.shape

    # Structural check against a reference with the same bf16 input rounding
    # the MXU sees — tight tolerance.
    ref_bf16 = reference_forward(x, params, conv_dtype=jnp.bfloat16)
    np.testing.assert_allclose(np.asarray(out), np.asarray(ref_bf16),
                               rtol=1e-3, atol=1e-3)
    # Accuracy sanity check against the pure-f32 reference (bf16-level tol).
    ref_f32 = reference_forward(x, params)
    np.testing.assert_allclose(np.asarray(out), np.asarray(ref_f32),
                               rtol=5e-2, atol=5e-2)
    print("KERNEL_OK")
</pallas_src>

<mosaic_0001>
module attributes {stable_mosaic.version = 11 : i64} {
  func.func @_cnn_feature_kernel(%arg0: i32, %arg1: memref<16x128xbf16, #tpu.memory_space<vmem>>, %arg2: memref<128x1664xbf16, #tpu.memory_space<vmem>>, %arg3: memref<1x1664xf32, #tpu.memory_space<vmem>>, %arg4: memref<2x128xf32, #tpu.memory_space<vmem>>) attributes {dimension_semantics = [#tpu.dimension_semantics<parallel>], iteration_bounds = array<i64: 1>, scalar_prefetch = 0 : i64, scratch_operands = 0 : i64, tpu.core_type = #tpu.core_type<tc>, window_params = [{transform_indices = @transform_0, window_bounds = array<i64: 16, 128>}, {pipeline_mode = #tpu.pipeline_mode<synchronous>, transform_indices = @transform_1, window_bounds = array<i64: 128, 1664>}, {pipeline_mode = #tpu.pipeline_mode<synchronous>, transform_indices = @transform_2, window_bounds = array<i64: 1, 1664>}, {transform_indices = @transform_3, window_bounds = array<i64: 2, 128>}]} {
    %c0 = arith.constant 0 : index
    %c0_0 = arith.constant 0 : index
    %0 = vector.load %arg1[%c0, %c0_0] : memref<16x128xbf16, #tpu.memory_space<vmem>>, vector<16x128xbf16>
    %c0_1 = arith.constant 0 : index
    %c0_2 = arith.constant 0 : index
    %1 = vector.load %arg2[%c0_1, %c0_2] : memref<128x1664xbf16, #tpu.memory_space<vmem>>, vector<128x1664xbf16>
    %cst = arith.constant dense<0.000000e+00> : vector<16x1664xf32>
    %2 = tpu.matmul %0, %1, %cst {dimension_numbers = #tpu.dot_dimension_numbers<[1], [0], [0], [1], [0, 0, 1, 1], [], []>} : vector<16x128xbf16>, vector<128x1664xbf16>, vector<16x1664xf32> -> vector<16x1664xf32>
    %c0_3 = arith.constant 0 : index
    %c0_4 = arith.constant 0 : index
    %3 = vector.load %arg3[%c0_3, %c0_4] : memref<1x1664xf32, #tpu.memory_space<vmem>>, vector<1x1664xf32>
    %4 = vector.broadcast %3 : vector<1x1664xf32> to vector<16x1664xf32>
    %5 = arith.addf %2, %4 : vector<16x1664xf32>
    %cst_5 = arith.constant 0.000000e+00 : f32
    %6 = vector.broadcast %cst_5 : f32 to vector<16x1664xf32>
    %7 = arith.maximumf %5, %6 : vector<16x1664xf32>
    %8 = vector.shape_cast %7 : vector<16x1664xf32> to vector<2x8x1664xf32>
    %cst_6 = arith.constant dense<0xFF800000> : vector<2x1664xf32>
    %9 = vector.multi_reduction <maximumf>, %8, %cst_6 [1] : vector<2x8x1664xf32> to vector<2x1664xf32>
    %10 = tpu.iota {dimensions = array<i32: 1>} : vector<2x128xi32>
    %cst_7 = arith.constant 0.000000e+00 : f32
    %11 = vector.broadcast %cst_7 : f32 to vector<2x128xf32>
    %12 = vector.extract_strided_slice %9 {offsets = [0, 0], sizes = [2, 97], strides = [1, 1]} : vector<2x1664xf32> to vector<2x97xf32>
    %cst_8 = arith.constant dense<0xFF800000> : vector<2xf32>
    %13 = vector.multi_reduction <maximumf>, %12, %cst_8 [1] : vector<2x97xf32> to vector<2xf32>
    %14 = vector.shape_cast %13 : vector<2xf32> to vector<2x1xf32>
    %c0_i32 = arith.constant 0 : i32
    %15 = vector.broadcast %c0_i32 : i32 to vector<2x128xi32>
    %16 = arith.cmpi eq, %10, %15 : vector<2x128xi32>
    %17 = vector.shape_cast %14 : vector<2x1xf32> to vector<2x1xf32>
    %18 = vector.broadcast %17 : vector<2x1xf32> to vector<2x128xf32>
    %19 = arith.select %16, %18, %11 : vector<2x128xi1>, vector<2x128xf32>
    %20 = vector.extract_strided_slice %9 {offsets = [0, 97], sizes = [2, 97], strides = [1, 1]} : vector<2x1664xf32> to vector<2x97xf32>
    %cst_9 = arith.constant dense<0xFF800000> : vector<2xf32>
    %21 = vector.multi_reduction <maximumf>, %20, %cst_9 [1] : vector<2x97xf32> to vector<2xf32>
    %22 = vector.shape_cast %21 : vector<2xf32> to vector<2x1xf32>
    %c1_i32 = arith.constant 1 : i32
    %23 = vector.broadcast %c1_i32 : i32 to vector<2x128xi32>
    %24 = arith.cmpi eq, %10, %23 : vector<2x128xi32>
    %25 = vector.shape_cast %22 : vector<2x1xf32> to vector<2x1xf32>
    %26 = vector.broadcast %25 : vector<2x1xf32> to vector<2x128xf32>
    %27 = arith.select %24, %26, %19 : vector<2x128xi1>, vector<2x128xf32>
    %28 = vector.extract_strided_slice %9 {offsets = [0, 194], sizes = [2, 97], strides = [1, 1]} : vector<2x1664xf32> to vector<2x97xf32>
    %cst_10 = arith.constant dense<0xFF800000> : vector<2xf32>
    %29 = vector.multi_reduction <maximumf>, %28, %cst_10 [1] : vector<2x97xf32> to vector<2xf32>
    %30 = vector.shape_cast %29 : vector<2xf32> to vector<2x1xf32>
    %c2_i32 = arith.constant 2 : i32
    %31 = vector.broadcast %c2_i32 : i32 to vector<2x128xi32>
    %32 = arith.cmpi eq, %10, %31 : vector<2x128xi32>
    %33 = vector.shape_cast %30 : vector<2x1xf32> to vector<2x1xf32>
    %34 = vector.broadcast %33 : vector<2x1xf32> to vector<2x128xf32>
    %35 = arith.select %32, %34, %27 : vector<2x128xi1>, vector<2x128xf32>
    %36 = vector.extract_strided_slice %9 {offsets = [0, 291], sizes = [2, 97], strides = [1, 1]} : vector<2x1664xf32> to vector<2x97xf32>
    %cst_11 = arith.constant dense<0xFF800000> : vector<2xf32>
    %37 = vector.multi_reduction <maximumf>, %36, %cst_11 [1] : vector<2x97xf32> to vector<2xf32>
    %38 = vector.shape_cast %37 : vector<2xf32> to vector<2x1xf32>
    %c3_i32 = arith.constant 3 : i32
    %39 = vector.broadcast %c3_i32 : i32 to vector<2x128xi32>
    %40 = arith.cmpi eq, %10, %39 : vector<2x128xi32>
    %41 = vector.shape_cast %38 : vector<2x1xf32> to vector<2x1xf32>
    %42 = vector.broadcast %41 : vector<2x1xf32> to vector<2x128xf32>
    %43 = arith.select %40, %42, %35 : vector<2x128xi1>, vector<2x128xf32>
    %44 = vector.extract_strided_slice %9 {offsets = [0, 388], sizes = [2, 97], strides = [1, 1]} : vector<2x1664xf32> to vector<2x97xf32>
    %cst_12 = arith.constant dense<0xFF800000> : vector<2xf32>
    %45 = vector.multi_reduction <maximumf>, %44, %cst_12 [1] : vector<2x97xf32> to vector<2xf32>
    %46 = vector.shape_cast %45 : vector<2xf32> to vector<2x1xf32>
    %c4_i32 = arith.constant 4 : i32
    %47 = vector.broadcast %c4_i32 : i32 to vector<2x128xi32>
    %48 = arith.cmpi eq, %10, %47 : vector<2x128xi32>
    %49 = vector.shape_cast %46 : vector<2x1xf32> to vector<2x1xf32>
    %50 = vector.broadcast %49 : vector<2x1xf32> to vector<2x128xf32>
    %51 = arith.select %48, %50, %43 : vector<2x128xi1>, vector<2x128xf32>
    %52 = vector.extract_strided_slice %9 {offsets = [0, 485], sizes = [2, 97], strides = [1, 1]} : vector<2x1664xf32> to vector<2x97xf32>
    %cst_13 = arith.constant dense<0xFF800000> : vector<2xf32>
    %53 = vector.multi_reduction <maximumf>, %52, %cst_13 [1] : vector<2x97xf32> to vector<2xf32>
    %54 = vector.shape_cast %53 : vector<2xf32> to vector<2x1xf32>
    %c5_i32 = arith.constant 5 : i32
    %55 = vector.broadcast %c5_i32 : i32 to vector<2x128xi32>
    %56 = arith.cmpi eq, %10, %55 : vector<2x128xi32>
    %57 = vector.shape_cast %54 : vector<2x1xf32> to vector<2x1xf32>
    %58 = vector.broadcast %57 : vector<2x1xf32> to vector<2x128xf32>
    %59 = arith.select %56, %58, %51 : vector<2x128xi1>, vector<2x128xf32>
    %60 = vector.extract_strided_slice %9 {offsets = [0, 582], sizes = [2, 97], strides = [1, 1]} : vector<2x1664xf32> to vector<2x97xf32>
    %cst_14 = arith.constant dense<0xFF800000> : vector<2xf32>
    %61 = vector.multi_reduction <maximumf>, %60, %cst_14 [1] : vector<2x97xf32> to vector<2xf32>
    %62 = vector.shape_cast %61 : vector<2xf32> to vector<2x1xf32>
    %c6_i32 = arith.constant 6 : i32
    %63 = vector.broadcast %c6_i32 : i32 to vector<2x128xi32>
    %64 = arith.cmpi eq, %10, %63 : vector<2x128xi32>
    %65 = vector.shape_cast %62 : vector<2x1xf32> to vector<2x1xf32>
    %66 = vector.broadcast %65 : vector<2x1xf32> to vector<2x128xf32>
    %67 = arith.select %64, %66, %59 : vector<2x128xi1>, vector<2x128xf32>
    %68 = vector.extract_strided_slice %9 {offsets = [0, 679], sizes = [2, 97], strides = [1, 1]} : vector<2x1664xf32> to vector<2x97xf32>
    %cst_15 = arith.constant dense<0xFF800000> : vector<2xf32>
    %69 = vector.multi_reduction <maximumf>, %68, %cst_15 [1] : vector<2x97xf32> to vector<2xf32>
    %70 = vector.shape_cast %69 : vector<2xf32> to vector<2x1xf32>
    %c7_i32 = arith.constant 7 : i32
    %71 = vector.broadcast %c7_i32 : i32 to vector<2x128xi32>
    %72 = arith.cmpi eq, %10, %71 : vector<2x128xi32>
    %73 = vector.shape_cast %70 : vector<2x1xf32> to vector<2x1xf32>
    %74 = vector.broadcast %73 : vector<2x1xf32> to vector<2x128xf32>
    %75 = arith.select %72, %74, %67 : vector<2x128xi1>, vector<2x128xf32>
    %76 = vector.extract_strided_slice %9 {offsets = [0, 896], sizes = [2, 65], strides = [1, 1]} : vector<2x1664xf32> to vector<2x65xf32>
    %cst_16 = arith.constant dense<0xFF800000> : vector<2xf32>
    %77 = vector.multi_reduction <maximumf>, %76, %cst_16 [1] : vector<2x65xf32> to vector<2xf32>
    %78 = vector.shape_cast %77 : vector<2xf32> to vector<2x1xf32>
    %c8_i32 = arith.constant 8 : i32
    %79 = vector.broadcast %c8_i32 : i32 to vector<2x128xi32>
    %80 = arith.cmpi eq, %10, %79 : vector<2x128xi32>
    %81 = vector.shape_cast %78 : vector<2x1xf32> to vector<2x1xf32>
    %82 = vector.broadcast %81 : vector<2x1xf32> to vector<2x128xf32>
    %83 = arith.select %80, %82, %75 : vector<2x128xi1>, vector<2x128xf32>
    %84 = vector.extract_strided_slice %9 {offsets = [0, 961], sizes = [2, 65], strides = [1, 1]} : vector<2x1664xf32> to vector<2x65xf32>
    %cst_17 = arith.constant dense<0xFF800000> : vector<2xf32>
    %85 = vector.multi_reduction <maximumf>, %84, %cst_17 [1] : vector<2x65xf32> to vector<2xf32>
    %86 = vector.shape_cast %85 : vector<2xf32> to vector<2x1xf32>
    %c9_i32 = arith.constant 9 : i32
    %87 = vector.broadcast %c9_i32 : i32 to vector<2x128xi32>
    %88 = arith.cmpi eq, %10, %87 : vector<2x128xi32>
    %89 = vector.shape_cast %86 : vector<2x1xf32> to vector<2x1xf32>
    %90 = vector.broadcast %89 : vector<2x1xf32> to vector<2x128xf32>
    %91 = arith.select %88, %90, %83 : vector<2x128xi1>, vector<2x128xf32>
    %92 = vector.extract_strided_slice %9 {offsets = [0, 1026], sizes = [2, 65], strides = [1, 1]} : vector<2x1664xf32> to vector<2x65xf32>
    %cst_18 = arith.constant dense<0xFF800000> : vector<2xf32>
    %93 = vector.multi_reduction <maximumf>, %92, %cst_18 [1] : vector<2x65xf32> to vector<2xf32>
    %94 = vector.shape_cast %93 : vector<2xf32> to vector<2x1xf32>
    %c10_i32 = arith.constant 10 : i32
    %95 = vector.broadcast %c10_i32 : i32 to vector<2x128xi32>
    %96 = arith.cmpi eq, %10, %95 : vector<2x128xi32>
    %97 = vector.shape_cast %94 : vector<2x1xf32> to vector<2x1xf32>
    %98 = vector.broadcast %97 : vector<2x1xf32> to vector<2x128xf32>
    %99 = arith.select %96, %98, %91 : vector<2x128xi1>, vector<2x128xf32>
    %100 = vector.extract_strided_slice %9 {offsets = [0, 1091], sizes = [2, 65], strides = [1, 1]} : vector<2x1664xf32> to vector<2x65xf32>
    %cst_19 = arith.constant dense<0xFF800000> : vector<2xf32>
    %101 = vector.multi_reduction <maximumf>, %100, %cst_19 [1] : vector<2x65xf32> to vector<2xf32>
    %102 = vector.shape_cast %101 : vector<2xf32> to vector<2x1xf32>
    %c11_i32 = arith.constant 11 : i32
    %103 = vector.broadcast %c11_i32 : i32 to vector<2x128xi32>
    %104 = arith.cmpi eq, %10, %103 : vector<2x128xi32>
    %105 = vector.shape_cast %102 : vector<2x1xf32> to vector<2x1xf32>
    %106 = vector.broadcast %105 : vector<2x1xf32> to vector<2x128xf32>
    %107 = arith.select %104, %106, %99 : vector<2x128xi1>, vector<2x128xf32>
    %108 = vector.extract_strided_slice %9 {offsets = [0, 1156], sizes = [2, 65], strides = [1, 1]} : vector<2x1664xf32> to vector<2x65xf32>
    %cst_20 = arith.constant dense<0xFF800000> : vector<2xf32>
    %109 = vector.multi_reduction <maximumf>, %108, %cst_20 [1] : vector<2x65xf32> to vector<2xf32>
    %110 = vector.shape_cast %109 : vector<2xf32> to vector<2x1xf32>
    %c12_i32 = arith.constant 12 : i32
    %111 = vector.broadcast %c12_i32 : i32 to vector<2x128xi32>
    %112 = arith.cmpi eq, %10, %111 : vector<2x128xi32>
    %113 = vector.shape_cast %110 : vector<2x1xf32> to vector<2x1xf32>
    %114 = vector.broadcast %113 : vector<2x1xf32> to vector<2x128xf32>
    %115 = arith.select %112, %114, %107 : vector<2x128xi1>, vector<2x128xf32>
    %116 = vector.extract_strided_slice %9 {offsets = [0, 1221], sizes = [2, 65], strides = [1, 1]} : vector<2x1664xf32> to vector<2x65xf32>
    %cst_21 = arith.constant dense<0xFF800000> : vector<2xf32>
    %117 = vector.multi_reduction <maximumf>, %116, %cst_21 [1] : vector<2x65xf32> to vector<2xf32>
    %118 = vector.shape_cast %117 : vector<2xf32> to vector<2x1xf32>
    %c13_i32 = arith.constant 13 : i32
    %119 = vector.broadcast %c13_i32 : i32 to vector<2x128xi32>
    %120 = arith.cmpi eq, %10, %119 : vector<2x128xi32>
    %121 = vector.shape_cast %118 : vector<2x1xf32> to vector<2x1xf32>
    %122 = vector.broadcast %121 : vector<2x1xf32> to vector<2x128xf32>
    %123 = arith.select %120, %122, %115 : vector<2x128xi1>, vector<2x128xf32>
    %124 = vector.extract_strided_slice %9 {offsets = [0, 1286], sizes = [2, 65], strides = [1, 1]} : vector<2x1664xf32> to vector<2x65xf32>
    %cst_22 = arith.constant dense<0xFF800000> : vector<2xf32>
    %125 = vector.multi_reduction <maximumf>, %124, %cst_22 [1] : vector<2x65xf32> to vector<2xf32>
    %126 = vector.shape_cast %125 : vector<2xf32> to vector<2x1xf32>
    %c14_i32 = arith.constant 14 : i32
    %127 = vector.broadcast %c14_i32 : i32 to vector<2x128xi32>
    %128 = arith.cmpi eq, %10, %127 : vector<2x128xi32>
    %129 = vector.shape_cast %126 : vector<2x1xf32> to vector<2x1xf32>
    %130 = vector.broadcast %129 : vector<2x1xf32> to vector<2x128xf32>
    %131 = arith.select %128, %130, %123 : vector<2x128xi1>, vector<2x128xf32>
    %132 = vector.extract_strided_slice %9 {offsets = [0, 1351], sizes = [2, 65], strides = [1, 1]} : vector<2x1664xf32> to vector<2x65xf32>
    %cst_23 = arith.constant dense<0xFF800000> : vector<2xf32>
    %133 = vector.multi_reduction <maximumf>, %132, %cst_23 [1] : vector<2x65xf32> to vector<2xf32>
    %134 = vector.shape_cast %133 : vector<2xf32> to vector<2x1xf32>
    %c15_i32 = arith.constant 15 : i32
    %135 = vector.broadcast %c15_i32 : i32 to vector<2x128xi32>
    %136 = arith.cmpi eq, %10, %135 : vector<2x128xi32>
    %137 = vector.shape_cast %134 : vector<2x1xf32> to vector<2x1xf32>
    %138 = vector.broadcast %137 : vector<2x1xf32> to vector<2x128xf32>
    %139 = arith.select %136, %138, %131 : vector<2x128xi1>, vector<2x128xf32>
    %140 = vector.extract_strided_slice %9 {offsets = [0, 1536], sizes = [2, 1], strides = [1, 1]} : vector<2x1664xf32> to vector<2x1xf32>
    %cst_24 = arith.constant dense<0xFF800000> : vector<2xf32>
    %141 = vector.multi_reduction <maximumf>, %140, %cst_24 [1] : vector<2x1xf32> to vector<2xf32>
    %142 = vector.shape_cast %141 : vector<2xf32> to vector<2x1xf32>
    %c16_i32 = arith.constant 16 : i32
    %143 = vector.broadcast %c16_i32 : i32 to vector<2x128xi32>
    %144 = arith.cmpi eq, %10, %143 : vector<2x128xi32>
    %145 = vector.shape_cast %142 : vector<2x1xf32> to vector<2x1xf32>
    %146 = vector.broadcast %145 : vector<2x1xf32> to vector<2x128xf32>
    %147 = arith.select %144, %146, %139 : vector<2x128xi1>, vector<2x128xf32>
    %148 = vector.extract_strided_slice %9 {offsets = [0, 1537], sizes = [2, 1], strides = [1, 1]} : vector<2x1664xf32> to vector<2x1xf32>
    %cst_25 = arith.constant dense<0xFF800000> : vector<2xf32>
    %149 = vector.multi_reduction <maximumf>, %148, %cst_25 [1] : vector<2x1xf32> to vector<2xf32>
    %150 = vector.shape_cast %149 : vector<2xf32> to vector<2x1xf32>
    %c17_i32 = arith.constant 17 : i32
    %151 = vector.broadcast %c17_i32 : i32 to vector<2x128xi32>
    %152 = arith.cmpi eq, %10, %151 : vector<2x128xi32>
    %153 = vector.shape_cast %150 : vector<2x1xf32> to vector<2x1xf32>
    %154 = vector.broadcast %153 : vector<2x1xf32> to vector<2x128xf32>
    %155 = arith.select %152, %154, %147 : vector<2x128xi1>, vector<2x128xf32>
    %156 = vector.extract_strided_slice %9 {offsets = [0, 1538], sizes = [2, 1], strides = [1, 1]} : vector<2x1664xf32> to vector<2x1xf32>
    %cst_26 = arith.constant dense<0xFF800000> : vector<2xf32>
    %157 = vector.multi_reduction <maximumf>, %156, %cst_26 [1] : vector<2x1xf32> to vector<2xf32>
    %158 = vector.shape_cast %157 : vector<2xf32> to vector<2x1xf32>
    %c18_i32 = arith.constant 18 : i32
    %159 = vector.broadcast %c18_i32 : i32 to vector<2x128xi32>
    %160 = arith.cmpi eq, %10, %159 : vector<2x128xi32>
    %161 = vector.shape_cast %158 : vector<2x1xf32> to vector<2x1xf32>
    %162 = vector.broadcast %161 : vector<2x1xf32> to vector<2x128xf32>
    %163 = arith.select %160, %162, %155 : vector<2x128xi1>, vector<2x128xf32>
    %164 = vector.extract_strided_slice %9 {offsets = [0, 1539], sizes = [2, 1], strides = [1, 1]} : vector<2x1664xf32> to vector<2x1xf32>
    %cst_27 = arith.constant dense<0xFF800000> : vector<2xf32>
    %165 = vector.multi_reduction <maximumf>, %164, %cst_27 [1] : vector<2x1xf32> to vector<2xf32>
    %166 = vector.shape_cast %165 : vector<2xf32> to vector<2x1xf32>
    %c19_i32 = arith.constant 19 : i32
    %167 = vector.broadcast %c19_i32 : i32 to vector<2x128xi32>
    %168 = arith.cmpi eq, %10, %167 : vector<2x128xi32>
    %169 = vector.shape_cast %166 : vector<2x1xf32> to vector<2x1xf32>
    %170 = vector.broadcast %169 : vector<2x1xf32> to vector<2x128xf32>
    %171 = arith.select %168, %170, %163 : vector<2x128xi1>, vector<2x128xf32>
    %172 = vector.extract_strided_slice %9 {offsets = [0, 1540], sizes = [2, 1], strides = [1, 1]} : vector<2x1664xf32> to vector<2x1xf32>
    %cst_28 = arith.constant dense<0xFF800000> : vector<2xf32>
    %173 = vector.multi_reduction <maximumf>, %172, %cst_28 [1] : vector<2x1xf32> to vector<2xf32>
    %174 = vector.shape_cast %173 : vector<2xf32> to vector<2x1xf32>
    %c20_i32 = arith.constant 20 : i32
    %175 = vector.broadcast %c20_i32 : i32 to vector<2x128xi32>
    %176 = arith.cmpi eq, %10, %175 : vector<2x128xi32>
    %177 = vector.shape_cast %174 : vector<2x1xf32> to vector<2x1xf32>
    %178 = vector.broadcast %177 : vector<2x1xf32> to vector<2x128xf32>
    %179 = arith.select %176, %178, %171 : vector<2x128xi1>, vector<2x128xf32>
    %180 = vector.extract_strided_slice %9 {offsets = [0, 1541], sizes = [2, 1], strides = [1, 1]} : vector<2x1664xf32> to vector<2x1xf32>
    %cst_29 = arith.constant dense<0xFF800000> : vector<2xf32>
    %181 = vector.multi_reduction <maximumf>, %180, %cst_29 [1] : vector<2x1xf32> to vector<2xf32>
    %182 = vector.shape_cast %181 : vector<2xf32> to vector<2x1xf32>
    %c21_i32 = arith.constant 21 : i32
    %183 = vector.broadcast %c21_i32 : i32 to vector<2x128xi32>
    %184 = arith.cmpi eq, %10, %183 : vector<2x128xi32>
    %185 = vector.shape_cast %182 : vector<2x1xf32> to vector<2x1xf32>
    %186 = vector.broadcast %185 : vector<2x1xf32> to vector<2x128xf32>
    %187 = arith.select %184, %186, %179 : vector<2x128xi1>, vector<2x128xf32>
    %188 = vector.extract_strided_slice %9 {offsets = [0, 1542], sizes = [2, 1], strides = [1, 1]} : vector<2x1664xf32> to vector<2x1xf32>
    %cst_30 = arith.constant dense<0xFF800000> : vector<2xf32>
    %189 = vector.multi_reduction <maximumf>, %188, %cst_30 [1] : vector<2x1xf32> to vector<2xf32>
    %190 = vector.shape_cast %189 : vector<2xf32> to vector<2x1xf32>
    %c22_i32 = arith.constant 22 : i32
    %191 = vector.broadcast %c22_i32 : i32 to vector<2x128xi32>
    %192 = arith.cmpi eq, %10, %191 : vector<2x128xi32>
    %193 = vector.shape_cast %190 : vector<2x1xf32> to vector<2x1xf32>
    %194 = vector.broadcast %193 : vector<2x1xf32> to vector<2x128xf32>
    %195 = arith.select %192, %194, %187 : vector<2x128xi1>, vector<2x128xf32>
    %196 = vector.extract_strided_slice %9 {offsets = [0, 1543], sizes = [2, 1], strides = [1, 1]} : vector<2x1664xf32> to vector<2x1xf32>
    %cst_31 = arith.constant dense<0xFF800000> : vector<2xf32>
    %197 = vector.multi_reduction <maximumf>, %196, %cst_31 [1] : vector<2x1xf32> to vector<2xf32>
    %198 = vector.shape_cast %197 : vector<2xf32> to vector<2x1xf32>
    %c23_i32 = arith.constant 23 : i32
    %199 = vector.broadcast %c23_i32 : i32 to vector<2x128xi32>
    %200 = arith.cmpi eq, %10, %199 : vector<2x128xi32>
    %201 = vector.shape_cast %198 : vector<2x1xf32> to vector<2x1xf32>
    %202 = vector.broadcast %201 : vector<2x1xf32> to vector<2x128xf32>
    %203 = arith.select %200, %202, %195 : vector<2x128xi1>, vector<2x128xf32>
    %c0_32 = arith.constant 0 : index
    %c0_33 = arith.constant 0 : index
    %204 = vector.load %arg4[%c0_32, %c0_33] : memref<2x128xf32, #tpu.memory_space<vmem>>, vector<2x128xf32>
    tpu.vector_store %arg4[%c0_32, %c0_33], %203 {strides = array<i32>} : memref<2x128xf32, #tpu.memory_space<vmem>>, vector<2x128xf32>,
    return
  }
  func.func @transform_0(%arg0: i32) -> (i32, i32) {
    %c0_i32 = arith.constant 0 : i32
    %c0_i32_0 = arith.constant 0 : i32
    return %arg0, %c0_i32 : i32, i32
  }
  func.func @transform_1(%arg0: i32) -> (i32, i32) {
    %c0_i32 = arith.constant 0 : i32
    %c0_i32_0 = arith.constant 0 : i32
    %c0_i32_1 = arith.constant 0 : i32
    return %c0_i32, %c0_i32_0 : i32, i32
  }
  func.func @transform_2(%arg0: i32) -> (i32, i32) {
    %c0_i32 = arith.constant 0 : i32
    %c0_i32_0 = arith.constant 0 : i32
    %c0_i32_1 = arith.constant 0 : i32
    return %c0_i32, %c0_i32_0 : i32, i32
  }
  func.func @transform_3(%arg0: i32) -> (i32, i32) {
    %c0_i32 = arith.constant 0 : i32
    %c0_i32_0 = arith.constant 0 : i32
    return %arg0, %c0_i32 : i32, i32
  }
}

</mosaic_0001>

<llo_original>
// kernel: tpu_custom_call.1
$region0: #{tpu_custom_call.1}
  #allocation0 [shape = 'u32[]', space=smem, size = 0x4, offset = 0x4, fixed_abs, tag = 'smem constant byte address 0x4 - core index']
  #allocation1 [shape = 'u32[144,128]{1,0:T(1,128)}', space=vmem, size = 0x12000, scoped, tag = 'internal scratch']
  %s0 = inlined_call_operand.hbm [shape: bf16[16,128], index: 0, kind: input, shape index: {}]
  %s1 = inlined_call_operand.hbm [shape: bf16[128,1664], index: 1, kind: input, shape index: {}]
  %s2 = inlined_call_operand.hbm [shape: f32[1,1664], index: 2, kind: input, shape index: {}]
  %s3 = inlined_call_operand.hbm [shape: f32[2,128], index: 3, kind: output, shape index: {}]
  %s4 = sld [smem:[#allocation0]]
  $region34: #{tpu_custom_call.1} parent=0
    _
  %s6 = ssub.s32 1, %s4
  %s7 = scalar_select 0, %s6, %s4
  $region1: #{tpu_custom_call.1} parent=0
    #allocation2 [shape = 'u8[4096]{0}', space=vmem, size = 0x1000, scoped, tag = 'input window, operand 0, single buffered']
    #allocation3 [shape = 's32[1]{0}', space=sflag, size = 0x4, scoped, tag = 'scoped memory for tpu_custom_call.1']
    #allocation4 [shape = 's32[1]{0}', space=sflag, size = 0x4, scoped, tag = 'scoped memory for tpu_custom_call.1']
    #allocation5 [shape = 'u8[425984]{0}', space=vmem, size = 0x68000, scoped, tag = 'input window, operand 1, single buffered']
    #allocation6 [shape = 's32[1]{0}', space=sflag, size = 0x4, scoped, tag = 'scoped memory for tpu_custom_call.1']
    #allocation7 [shape = 'u8[6656]{0}', space=vmem, size = 0x1c00, scoped, tag = 'input window, operand 2, single buffered']
    #allocation8 [shape = 'u8[1024]{0}', space=vmem, size = 0x400, scoped, tag = 'output window, operand 0, single buffered']
    %8 = vsyncpa [#allocation3], 0
    %9 = vsyncpa [#allocation6], 0
    %10 = vsyncpa [#allocation4], 0
    // Predicated region
    $region2: #{tpu_custom_call.1} parent=1 // pred_check
      _
    $region3: #{tpu_custom_call.1} parent=1 // pred_check_branch
      %12 = sbr.rel (0) target = $region5
    $region4: #{tpu_custom_call.1} parent=1 // pred_region
      %s14 = ssub.s32 128, 128
      %15 = vsyncadd [#allocation3], %s14
      %s16 = sshll.u32 [#allocation2], 4
      %s17 = int_to_ptr.vmem [resolvable:$true] %s16
      %22 = dma.hbm_to_vmem [thread:$0]  %s0, 128, %s17, [#allocation3], 64, 64, 4
    $region5: #{tpu_custom_call.1} parent=1 // pred_fallthru
      _
    // Predicated region
    $region6: #{tpu_custom_call.1} parent=1 // pred_check
      _
    $region7: #{tpu_custom_call.1} parent=1 // pred_check_branch
      %24 = sbr.rel (0) target = $region9
    $region8: #{tpu_custom_call.1} parent=1 // pred_region
      %s26 = ssub.s32 13312, 13312
      %27 = vsyncadd [#allocation6], %s26
      %s28 = sshll.u32 [#allocation5], 4
      %s29 = int_to_ptr.vmem [resolvable:$true] %s28
      %34 = dma.hbm_to_vmem [thread:$0]  %s1, 13312, %s29, [#allocation6], 832, 832, 52
    $region9: #{tpu_custom_call.1} parent=1 // pred_fallthru
      _
    // Predicated region
    $region10: #{tpu_custom_call.1} parent=1 // pred_check
      _
    $region11: #{tpu_custom_call.1} parent=1 // pred_check_branch
      %36 = sbr.rel (0) target = $region13
    $region12: #{tpu_custom_call.1} parent=1 // pred_region
      %s38 = ssub.s32 208, 208
      %39 = vsyncadd [#allocation6], %s38
      %s41 = sshll.u32 [#allocation7], 4
      %s42 = int_to_ptr.vmem [resolvable:$true] %s41
      %44 = dma.hbm_to_vmem [thread:$0]  %s2, 208, %s42, [#allocation6]
    $region13: #{tpu_custom_call.1} parent=1 // pred_fallthru
      _
    // Predicated region
    $region14: #{tpu_custom_call.1} parent=1 // pred_check
      _
    $region15: #{tpu_custom_call.1} parent=1 // pred_check_branch
      %46 = sbr.rel (0) target = $region17
    $region16: #{tpu_custom_call.1} parent=1 // pred_region
      %47 = dma.done [#allocation3], 128
    $region17: #{tpu_custom_call.1} parent=1 // pred_fallthru
      _
    // Predicated region
    $region18: #{tpu_custom_call.1} parent=1 // pred_check
      _
    $region19: #{tpu_custom_call.1} parent=1 // pred_check_branch
      %49 = sbr.rel (0) target = $region21
    $region20: #{tpu_custom_call.1} parent=1 // pred_region
      %50 = dma.done [#allocation6], 13312
    $region21: #{tpu_custom_call.1} parent=1 // pred_fallthru
      _
    // Predicated region
    $region22: #{tpu_custom_call.1} parent=1 // pred_check
      _
    $region23: #{tpu_custom_call.1} parent=1 // pred_check_branch
      %52 = sbr.rel (0) target = $region25
    $region24: #{tpu_custom_call.1} parent=1 // pred_region
      %53 = dma.done [#allocation6], 208
    $region25: #{tpu_custom_call.1} parent=1 // pred_fallthru
      _
    %v55 = vld [vmem:[#allocation2] sm:$0xf]
    %v56 = vld [vmem:[#allocation2 + $0x4] sm:$0xf]
    %v57 = vld [vmem:[#allocation5] sm:$0xff]
    %v58 = vld [vmem:[#allocation5 + $0x8] sm:$0xff]
    %v59 = vld [vmem:[#allocation5 + $0x10] sm:$0xff]
    %v60 = vld [vmem:[#allocation5 + $0x18] sm:$0xff]
    %v61 = vld [vmem:[#allocation5 + $0x20] sm:$0xff]
    %v62 = vld [vmem:[#allocation5 + $0x28] sm:$0xff]
    %v63 = vld [vmem:[#allocation5 + $0x30] sm:$0xf]
    %v64 = vld [vmem:[#allocation5 + $0x34] sm:$0xff]
    %v65 = vld [vmem:[#allocation5 + $0x3c] sm:$0xff]
    %v66 = vld [vmem:[#allocation5 + $0x44] sm:$0xff]
    %v67 = vld [vmem:[#allocation5 + $0x4c] sm:$0xff]
    %v68 = vld [vmem:[#allocation5 + $0x54] sm:$0xff]
    %v69 = vld [vmem:[#allocation5 + $0x5c] sm:$0xff]
    %v70 = vld [vmem:[#allocation5 + $0x64] sm:$0xf]
    %v71 = vld [vmem:[#allocation5 + $0x68] sm:$0xff]
    %v72 = vld [vmem:[#allocation5 + $0x70] sm:$0xff]
    %v73 = vld [vmem:[#allocation5 + $0x78] sm:$0xff]
    %v74 = vld [vmem:[#allocation5 + $0x80] sm:$0xff]
    %v75 = vld [vmem:[#allocation5 + $0x88] sm:$0xff]
    %v76 = vld [vmem:[#allocation5 + $0x90] sm:$0xff]
    %v77 = vld [vmem:[#allocation5 + $0x98] sm:$0xf]
    %v78 = vld [vmem:[#allocation5 + $0x9c] sm:$0xff]
    %v79 = vld [vmem:[#allocation5 + $0xa4] sm:$0xff]
    %v80 = vld [vmem:[#allocation5 + $0xac] sm:$0xff]
    %v81 = vld [vmem:[#allocation5 + $0xb4] sm:$0xff]
    %v82 = vld [vmem:[#allocation5 + $0xbc] sm:$0xff]
    %v83 = vld [vmem:[#allocation5 + $0xc4] sm:$0xff]
    %v84 = vld [vmem:[#allocation5 + $0xcc] sm:$0xf]
    %v85 = vld [vmem:[#allocation5 + $0xd0] sm:$0xff]
    %v86 = vld [vmem:[#allocation5 + $0xd8] sm:$0xff]
    %v87 = vld [vmem:[#allocation5 + $0xe0] sm:$0xff]
    %v88 = vld [vmem:[#allocation5 + $0xe8] sm:$0xff]
    %v89 = vld [vmem:[#allocation5 + $0xf0] sm:$0xff]
    %v90 = vld [vmem:[#allocation5 + $0xf8] sm:$0xff]
    %v91 = vld [vmem:[#allocation5 + $0x100] sm:$0xf]
    %v92 = vld [vmem:[#allocation5 + $0x104] sm:$0xff]
    %v93 = vld [vmem:[#allocation5 + $0x10c] sm:$0xff]
    %v94 = vld [vmem:[#allocation5 + $0x114] sm:$0xff]
    %v95 = vld [vmem:[#allocation5 + $0x11c] sm:$0xff]
    %v96 = vld [vmem:[#allocation5 + $0x124] sm:$0xff]
    %v97 = vld [vmem:[#allocation5 + $0x12c] sm:$0xff]
    %v98 = vld [vmem:[#allocation5 + $0x134] sm:$0xf]
    %v99 = vld [vmem:[#allocation5 + $0x138] sm:$0xff]
    %v100 = vld [vmem:[#allocation5 + $0x140] sm:$0xff]
    %v101 = vld [vmem:[#allocation5 + $0x148] sm:$0xff]
    %v102 = vld [vmem:[#allocation5 + $0x150] sm:$0xff]
    %v103 = vld [vmem:[#allocation5 + $0x158] sm:$0xff]
    %v104 = vld [vmem:[#allocation5 + $0x160] sm:$0xff]
    %v105 = vld [vmem:[#allocation5 + $0x168] sm:$0xf]
    %v106 = vld [vmem:[#allocation5 + $0x16c] sm:$0xff]
    %v107 = vld [vmem:[#allocation5 + $0x174] sm:$0xff]
    %v108 = vld [vmem:[#allocation5 + $0x17c] sm:$0xff]
    %v109 = vld [vmem:[#allocation5 + $0x184] sm:$0xff]
    %v110 = vld [vmem:[#allocation5 + $0x18c] sm:$0xff]
    %v111 = vld [vmem:[#allocation5 + $0x194] sm:$0xff]
    %v112 = vld [vmem:[#allocation5 + $0x19c] sm:$0xf]
    %v113 = vld [vmem:[#allocation5 + $0x1a0] sm:$0xff]
    %v114 = vld [vmem:[#allocation5 + $0x1a8] sm:$0xff]
    %v115 = vld [vmem:[#allocation5 + $0x1b0] sm:$0xff]
    %v116 = vld [vmem:[#allocation5 + $0x1b8] sm:$0xff]
    %v117 = vld [vmem:[#allocation5 + $0x1c0] sm:$0xff]
    %v118 = vld [vmem:[#allocation5 + $0x1c8] sm:$0xff]
    %v119 = vld [vmem:[#allocation5 + $0x1d0] sm:$0xf]
    %v120 = vld [vmem:[#allocation5 + $0x1d4] sm:$0xff]
    %v121 = vld [vmem:[#allocation5 + $0x1dc] sm:$0xff]
    %v122 = vld [vmem:[#allocation5 + $0x1e4] sm:$0xff]
    %v123 = vld [vmem:[#allocation5 + $0x1ec] sm:$0xff]
    %v124 = vld [vmem:[#allocation5 + $0x1f4] sm:$0xff]
    %v125 = vld [vmem:[#allocation5 + $0x1fc] sm:$0xff]
    %v126 = vld [vmem:[#allocation5 + $0x204] sm:$0xf]
    %v127 = vld [vmem:[#allocation5 + $0x208] sm:$0xff]
    %v128 = vld [vmem:[#allocation5 + $0x210] sm:$0xff]
    %v129 = vld [vmem:[#allocation5 + $0x218] sm:$0xff]
    %v130 = vld [vmem:[#allocation5 + $0x220] sm:$0xff]
    %v131 = vld [vmem:[#allocation5 + $0x228] sm:$0xff]
    %v132 = vld [vmem:[#allocation5 + $0x230] sm:$0xff]
    %v133 = vld [vmem:[#allocation5 + $0x238] sm:$0xf]
    %v134 = vld [vmem:[#allocation5 + $0x23c] sm:$0xff]
    %v135 = vld [vmem:[#allocation5 + $0x244] sm:$0xff]
    %v136 = vld [vmem:[#allocation5 + $0x24c] sm:$0xff]
    %v137 = vld [vmem:[#allocation5 + $0x254] sm:$0xff]
    %v138 = vld [vmem:[#allocation5 + $0x25c] sm:$0xff]
    %v139 = vld [vmem:[#allocation5 + $0x264] sm:$0xff]
    %v140 = vld [vmem:[#allocation5 + $0x26c] sm:$0xf]
    %v141 = vld [vmem:[#allocation5 + $0x270] sm:$0xff]
    %v142 = vld [vmem:[#allocation5 + $0x278] sm:$0xff]
    %v143 = vld [vmem:[#allocation5 + $0x280] sm:$0xff]
    %v144 = vld [vmem:[#allocation5 + $0x288] sm:$0xff]
    %v145 = vld [vmem:[#allocation5 + $0x290] sm:$0xff]
    %v146 = vld [vmem:[#allocation5 + $0x298] sm:$0xff]
    %v147 = vld [vmem:[#allocation5 + $0x2a0] sm:$0xf]
    %v148 = vld [vmem:[#allocation5 + $0x2a4] sm:$0xff]
    %v149 = vld [vmem:[#allocation5 + $0x2ac] sm:$0xff]
    %v150 = vld [vmem:[#allocation5 + $0x2b4] sm:$0xff]
    %v151 = vld [vmem:[#allocation5 + $0x2bc] sm:$0xff]
    %v152 = vld [vmem:[#allocation5 + $0x2c4] sm:$0xff]
    %v153 = vld [vmem:[#allocation5 + $0x2cc] sm:$0xff]
    %v154 = vld [vmem:[#allocation5 + $0x2d4] sm:$0xf]
    %v155 = vld [vmem:[#allocation5 + $0x2d8] sm:$0xff]
    %v156 = vld [vmem:[#allocation5 + $0x2e0] sm:$0xff]
    %v157 = vld [vmem:[#allocation5 + $0x2e8] sm:$0xff]
    %v158 = vld [vmem:[#allocation5 + $0x2f0] sm:$0xff]
    %v159 = vld [vmem:[#allocation5 + $0x2f8] sm:$0xff]
    %v160 = vld [vmem:[#allocation5 + $0x300] sm:$0xff]
    %v161 = vld [vmem:[#allocation5 + $0x308] sm:$0xf]
    %v162 = vld [vmem:[#allocation5 + $0x30c] sm:$0xff]
    %v163 = vld [vmem:[#allocation5 + $0x314] sm:$0xff]
    %v164 = vld [vmem:[#allocation5 + $0x31c] sm:$0xff]
    %v165 = vld [vmem:[#allocation5 + $0x324] sm:$0xff]
    %v166 = vld [vmem:[#allocation5 + $0x32c] sm:$0xff]
    %v167 = vld [vmem:[#allocation5 + $0x334] sm:$0xff]
    %v168 = vld [vmem:[#allocation5 + $0x33c] sm:$0xf]
    %v169 = vld [vmem:[#allocation7] sm:$0xff]
    %v170 = vld [vmem:[#allocation7 + $0x8] sm:$0x1f]
    %v173 = vlaneseq
    %v174 = vshrl.u32 %v173, 7
    %v175 = vsub.s32 0, %v174
    %v176 = vrot.slane %v169, %v175
    %v177 = vlaneseq
    %v178 = vshrl.u32 %v177, 7
    %v179 = vsub.s32 1, %v178
    %v180 = vrot.slane %v169, %v179
    %v181 = vlaneseq
    %v182 = vshrl.u32 %v181, 7
    %v183 = vsub.s32 2, %v182
    %v184 = vrot.slane %v169, %v183
    %v185 = vlaneseq
    %v186 = vshrl.u32 %v185, 7
    %v187 = vsub.s32 3, %v186
    %v188 = vrot.slane %v169, %v187
    %v189 = vlaneseq
    %v190 = vshrl.u32 %v189, 7
    %v191 = vsub.s32 4, %v190
    %v192 = vrot.slane %v169, %v191
    %v193 = vlaneseq
    %v194 = vshrl.u32 %v193, 7
    %v195 = vsub.s32 5, %v194
    %v196 = vrot.slane %v169, %v195
    %v197 = vlaneseq
    %v198 = vshrl.u32 %v197, 7
    %v199 = vsub.s32 6, %v198
    %v200 = vrot.slane %v169, %v199
    %v201 = vlaneseq
    %v202 = vshrl.u32 %v201, 7
    %v203 = vsub.s32 7, %v202
    %v204 = vrot.slane %v169, %v203
    %v205 = vlaneseq
    %v206 = vshrl.u32 %v205, 7
    %v207 = vsub.s32 0, %v206
    %v208 = vrot.slane %v170, %v207
    %v209 = vlaneseq
    %v210 = vshrl.u32 %v209, 7
    %v211 = vsub.s32 1, %v210
    %v212 = vrot.slane %v170, %v211
    %v213 = vlaneseq
    %v214 = vshrl.u32 %v213, 7
    %v215 = vsub.s32 2, %v214
    %v216 = vrot.slane %v170, %v215
    %v217 = vlaneseq
    %v218 = vshrl.u32 %v217, 7
    %v219 = vsub.s32 3, %v218
    %v220 = vrot.slane %v170, %v219
    %v221 = vlaneseq
    %v222 = vshrl.u32 %v221, 7
    %v223 = vsub.s32 4, %v222
    %v224 = vrot.slane %v170, %v223
    %v240 = vunpack.c.l.b16 %v55
    %v241 = vunpack.c.l.b16 %v56
    %v242 = vpack.c.b16 %v241, %v240
    %v356 = vunpack.c.l.b16 %v57
    %v357 = vunpack.c.h.b16 %v57
    %v358 = vunpack.c.l.b16 %v58
    %v359 = vunpack.c.h.b16 %v58
    %v360 = vunpack.c.l.b16 %v59
    %v361 = vunpack.c.h.b16 %v59
    %v362 = vunpack.c.l.b16 %v60
    %v363 = vunpack.c.h.b16 %v60
    %v364 = vunpack.c.l.b16 %v61
    %v365 = vunpack.c.h.b16 %v61
    %v366 = vunpack.c.l.b16 %v62
    %v367 = vunpack.c.h.b16 %v62
    %v368 = vunpack.c.l.b16 %v63
    %v369 = vunpack.c.l.b16 %v64
    %v370 = vunpack.c.h.b16 %v64
    %v371 = vunpack.c.l.b16 %v65
    %v372 = vunpack.c.h.b16 %v65
    %v373 = vunpack.c.l.b16 %v66
    %v374 = vunpack.c.h.b16 %v66
    %v375 = vunpack.c.l.b16 %v67
    %v376 = vunpack.c.h.b16 %v67
    %v377 = vunpack.c.l.b16 %v68
    %v378 = vunpack.c.h.b16 %v68
    %v379 = vunpack.c.l.b16 %v69
    %v380 = vunpack.c.h.b16 %v69
    %v381 = vunpack.c.l.b16 %v70
    %v382 = vunpack.c.l.b16 %v71
    %v383 = vunpack.c.h.b16 %v71
    %v384 = vunpack.c.l.b16 %v72
    %v385 = vunpack.c.h.b16 %v72
    %v386 = vunpack.c.l.b16 %v73
    %v387 = vunpack.c.h.b16 %v73
    %v388 = vunpack.c.l.b16 %v74
    %v389 = vunpack.c.h.b16 %v74
    %v390 = vunpack.c.l.b16 %v75
    %v391 = vunpack.c.h.b16 %v75
    %v392 = vunpack.c.l.b16 %v76
    %v393 = vunpack.c.h.b16 %v76
    %v394 = vunpack.c.l.b16 %v77
    %v395 = vunpack.c.l.b16 %v78
    %v396 = vunpack.c.h.b16 %v78
    %v397 = vunpack.c.l.b16 %v79
    %v398 = vunpack.c.h.b16 %v79
    %v399 = vunpack.c.l.b16 %v80
    %v400 = vunpack.c.h.b16 %v80
    %v401 = vunpack.c.l.b16 %v81
    %v402 = vunpack.c.h.b16 %v81
    %v403 = vunpack.c.l.b16 %v82
    %v404 = vunpack.c.h.b16 %v82
    %v405 = vunpack.c.l.b16 %v83
    %v406 = vunpack.c.h.b16 %v83
    %v407 = vunpack.c.l.b16 %v84
    %v408 = vunpack.c.l.b16 %v85
    %v409 = vunpack.c.h.b16 %v85
    %v410 = vunpack.c.l.b16 %v86
    %v411 = vunpack.c.h.b16 %v86
    %v412 = vunpack.c.l.b16 %v87
    %v413 = vunpack.c.h.b16 %v87
    %v414 = vunpack.c.l.b16 %v88
    %v415 = vunpack.c.h.b16 %v88
    %v416 = vunpack.c.l.b16 %v89
    %v417 = vunpack.c.h.b16 %v89
    %v418 = vunpack.c.l.b16 %v90
    %v419 = vunpack.c.h.b16 %v90
    %v420 = vunpack.c.l.b16 %v91
    %v421 = vunpack.c.l.b16 %v92
    %v422 = vunpack.c.h.b16 %v92
    %v423 = vunpack.c.l.b16 %v93
    %v424 = vunpack.c.h.b16 %v93
    %v425 = vunpack.c.l.b16 %v94
    %v426 = vunpack.c.h.b16 %v94
    %v427 = vunpack.c.l.b16 %v95
    %v428 = vunpack.c.h.b16 %v95
    %v429 = vunpack.c.l.b16 %v96
    %v430 = vunpack.c.h.b16 %v96
    %v431 = vunpack.c.l.b16 %v97
    %v432 = vunpack.c.h.b16 %v97
    %v433 = vunpack.c.l.b16 %v98
    %v434 = vunpack.c.l.b16 %v99
    %v435 = vunpack.c.h.b16 %v99
    %v436 = vunpack.c.l.b16 %v100
    %v437 = vunpack.c.h.b16 %v100
    %v438 = vunpack.c.l.b16 %v101
    %v439 = vunpack.c.h.b16 %v101
    %v440 = vunpack.c.l.b16 %v102
    %v441 = vunpack.c.h.b16 %v102
    %v442 = vunpack.c.l.b16 %v103
    %v443 = vunpack.c.h.b16 %v103
    %v444 = vunpack.c.l.b16 %v104
    %v445 = vunpack.c.h.b16 %v104
    %v446 = vunpack.c.l.b16 %v105
    %v447 = vunpack.c.l.b16 %v106
    %v448 = vunpack.c.h.b16 %v106
    %v449 = vunpack.c.l.b16 %v107
    %v450 = vunpack.c.h.b16 %v107
    %v451 = vunpack.c.l.b16 %v108
    %v452 = vunpack.c.h.b16 %v108
    %v453 = vunpack.c.l.b16 %v109
    %v454 = vunpack.c.h.b16 %v109
    %v455 = vunpack.c.l.b16 %v110
    %v456 = vunpack.c.h.b16 %v110
    %v457 = vunpack.c.l.b16 %v111
    %v458 = vunpack.c.h.b16 %v111
    %v459 = vunpack.c.l.b16 %v112
    %v460 = vunpack.c.l.b16 %v113
    %v461 = vunpack.c.h.b16 %v113
    %v462 = vunpack.c.l.b16 %v114
    %v463 = vunpack.c.h.b16 %v114
    %v464 = vunpack.c.l.b16 %v115
    %v465 = vunpack.c.h.b16 %v115
    %v466 = vunpack.c.l.b16 %v116
    %v467 = vunpack.c.h.b16 %v116
    %v468 = vunpack.c.l.b16 %v117
    %v469 = vunpack.c.h.b16 %v117
    %v470 = vunpack.c.l.b16 %v118
    %v471 = vunpack.c.h.b16 %v118
    %v472 = vunpack.c.l.b16 %v119
    %v473 = vunpack.c.l.b16 %v120
    %v474 = vunpack.c.h.b16 %v120
    %v475 = vunpack.c.l.b16 %v121
    %v476 = vunpack.c.h.b16 %v121
    %v477 = vunpack.c.l.b16 %v122
    %v478 = vunpack.c.h.b16 %v122
    %v479 = vunpack.c.l.b16 %v123
    %v480 = vunpack.c.h.b16 %v123
    %v481 = vunpack.c.l.b16 %v124
    %v482 = vunpack.c.h.b16 %v124
    %v483 = vunpack.c.l.b16 %v125
    %v484 = vunpack.c.h.b16 %v125
    %v485 = vunpack.c.l.b16 %v126
    %v486 = vunpack.c.l.b16 %v127
    %v487 = vunpack.c.h.b16 %v127
    %v488 = vunpack.c.l.b16 %v128
    %v489 = vunpack.c.h.b16 %v128
    %v490 = vunpack.c.l.b16 %v129
    %v491 = vunpack.c.h.b16 %v129
    %v492 = vunpack.c.l.b16 %v130
    %v493 = vunpack.c.h.b16 %v130
    %v494 = vunpack.c.l.b16 %v131
    %v495 = vunpack.c.h.b16 %v131
    %v496 = vunpack.c.l.b16 %v132
    %v497 = vunpack.c.h.b16 %v132
    %v498 = vunpack.c.l.b16 %v133
    %v499 = vunpack.c.l.b16 %v134
    %v500 = vunpack.c.h.b16 %v134
    %v501 = vunpack.c.l.b16 %v135
    %v502 = vunpack.c.h.b16 %v135
    %v503 = vunpack.c.l.b16 %v136
    %v504 = vunpack.c.h.b16 %v136
    %v505 = vunpack.c.l.b16 %v137
    %v506 = vunpack.c.h.b16 %v137
    %v507 = vunpack.c.l.b16 %v138
    %v508 = vunpack.c.h.b16 %v138
    %v509 = vunpack.c.l.b16 %v139
    %v510 = vunpack.c.h.b16 %v139
    %v511 = vunpack.c.l.b16 %v140
    %v512 = vunpack.c.l.b16 %v141
    %v513 = vunpack.c.h.b16 %v141
    %v514 = vunpack.c.l.b16 %v142
    %v515 = vunpack.c.h.b16 %v142
    %v516 = vunpack.c.l.b16 %v143
    %v517 = vunpack.c.h.b16 %v143
    %v518 = vunpack.c.l.b16 %v144
    %v519 = vunpack.c.h.b16 %v144
    %v520 = vunpack.c.l.b16 %v145
    %v521 = vunpack.c.h.b16 %v145
    %v522 = vunpack.c.l.b16 %v146
    %v523 = vunpack.c.h.b16 %v146
    %v524 = vunpack.c.l.b16 %v147
    %v525 = vunpack.c.l.b16 %v148
    %v526 = vunpack.c.h.b16 %v148
    %v527 = vunpack.c.l.b16 %v149
    %v528 = vunpack.c.h.b16 %v149
    %v529 = vunpack.c.l.b16 %v150
    %v530 = vunpack.c.h.b16 %v150
    %v531 = vunpack.c.l.b16 %v151
    %v532 = vunpack.c.h.b16 %v151
    %v533 = vunpack.c.l.b16 %v152
    %v534 = vunpack.c.h.b16 %v152
    %v535 = vunpack.c.l.b16 %v153
    %v536 = vunpack.c.h.b16 %v153
    %v537 = vunpack.c.l.b16 %v154
    %v538 = vunpack.c.l.b16 %v155
    %v539 = vunpack.c.h.b16 %v155
    %v540 = vunpack.c.l.b16 %v156
    %v541 = vunpack.c.h.b16 %v156
    %v542 = vunpack.c.l.b16 %v157
    %v543 = vunpack.c.h.b16 %v157
    %v544 = vunpack.c.l.b16 %v158
    %v545 = vunpack.c.h.b16 %v158
    %v546 = vunpack.c.l.b16 %v159
    %v547 = vunpack.c.h.b16 %v159
    %v548 = vunpack.c.l.b16 %v160
    %v549 = vunpack.c.h.b16 %v160
    %v550 = vunpack.c.l.b16 %v161
    %v551 = vunpack.c.l.b16 %v162
    %v552 = vunpack.c.h.b16 %v162
    %v553 = vunpack.c.l.b16 %v163
    %v554 = vunpack.c.h.b16 %v163
    %v555 = vunpack.c.l.b16 %v164
    %v556 = vunpack.c.h.b16 %v164
    %v557 = vunpack.c.l.b16 %v165
    %v558 = vunpack.c.h.b16 %v165
    %v559 = vunpack.c.l.b16 %v166
    %v560 = vunpack.c.h.b16 %v166
    %v561 = vunpack.c.l.b16 %v167
    %v562 = vunpack.c.h.b16 %v167
    %v563 = vunpack.c.l.b16 %v168
    %v564 = vpack.c.b16 %v369, %v356
    %v565 = vpack.c.b16 %v370, %v357
    %v566 = vpack.c.b16 %v371, %v358
    %v567 = vpack.c.b16 %v372, %v359
    %v568 = vpack.c.b16 %v373, %v360
    %v569 = vpack.c.b16 %v374, %v361
    %v570 = vpack.c.b16 %v375, %v362
    %v571 = vpack.c.b16 %v376, %v363
    %v572 = vpack.c.b16 %v377, %v364
    %v573 = vpack.c.b16 %v378, %v365
    %v574 = vpack.c.b16 %v379, %v366
    %v575 = vpack.c.b16 %v380, %v367
    %v576 = vpack.c.b16 %v381, %v368
    %v577 = vpack.c.b16 %v395, %v382
    %v578 = vpack.c.b16 %v396, %v383
    %v579 = vpack.c.b16 %v397, %v384
    %v580 = vpack.c.b16 %v398, %v385
    %v581 = vpack.c.b16 %v399, %v386
    %v582 = vpack.c.b16 %v400, %v387
    %v583 = vpack.c.b16 %v401, %v388
    %v584 = vpack.c.b16 %v402, %v389
    %v585 = vpack.c.b16 %v403, %v390
    %v586 = vpack.c.b16 %v404, %v391
    %v587 = vpack.c.b16 %v405, %v392
    %v588 = vpack.c.b16 %v406, %v393
    %v589 = vpack.c.b16 %v407, %v394
    %v590 = vpack.c.b16 %v421, %v408
    %v591 = vpack.c.b16 %v422, %v409
    %v592 = vpack.c.b16 %v423, %v410
    %v593 = vpack.c.b16 %v424, %v411
    %v594 = vpack.c.b16 %v425, %v412
    %v595 = vpack.c.b16 %v426, %v413
    %v596 = vpack.c.b16 %v427, %v414
    %v597 = vpack.c.b16 %v428, %v415
    %v598 = vpack.c.b16 %v429, %v416
    %v599 = vpack.c.b16 %v430, %v417
    %v600 = vpack.c.b16 %v431, %v418
    %v601 = vpack.c.b16 %v432, %v419
    %v602 = vpack.c.b16 %v433, %v420
    %v603 = vpack.c.b16 %v447, %v434
    %v604 = vpack.c.b16 %v448, %v435
    %v605 = vpack.c.b16 %v449, %v436
    %v606 = vpack.c.b16 %v450, %v437
    %v607 = vpack.c.b16 %v451, %v438
    %v608 = vpack.c.b16 %v452, %v439
    %v609 = vpack.c.b16 %v453, %v440
    %v610 = vpack.c.b16 %v454, %v441
    %v611 = vpack.c.b16 %v455, %v442
    %v612 = vpack.c.b16 %v456, %v443
    %v613 = vpack.c.b16 %v457, %v444
    %v614 = vpack.c.b16 %v458, %v445
    %v615 = vpack.c.b16 %v459, %v446
    %v616 = vpack.c.b16 %v473, %v460
    %v617 = vpack.c.b16 %v474, %v461
    %v618 = vpack.c.b16 %v475, %v462
    %v619 = vpack.c.b16 %v476, %v463
    %v620 = vpack.c.b16 %v477, %v464
    %v621 = vpack.c.b16 %v478, %v465
    %v622 = vpack.c.b16 %v479, %v466
    %v623 = vpack.c.b16 %v480, %v467
    %v624 = vpack.c.b16 %v481, %v468
    %v625 = vpack.c.b16 %v482, %v469
    %v626 = vpack.c.b16 %v483, %v470
    %v627 = vpack.c.b16 %v484, %v471
    %v628 = vpack.c.b16 %v485, %v472
    %v629 = vpack.c.b16 %v499, %v486
    %v630 = vpack.c.b16 %v500, %v487
    %v631 = vpack.c.b16 %v501, %v488
    %v632 = vpack.c.b16 %v502, %v489
    %v633 = vpack.c.b16 %v503, %v490
    %v634 = vpack.c.b16 %v504, %v491
    %v635 = vpack.c.b16 %v505, %v492
    %v636 = vpack.c.b16 %v506, %v493
    %v637 = vpack.c.b16 %v507, %v494
    %v638 = vpack.c.b16 %v508, %v495
    %v639 = vpack.c.b16 %v509, %v496
    %v640 = vpack.c.b16 %v510, %v497
    %v641 = vpack.c.b16 %v511, %v498
    %v642 = vpack.c.b16 %v525, %v512
    %v643 = vpack.c.b16 %v526, %v513
    %v644 = vpack.c.b16 %v527, %v514
    %v645 = vpack.c.b16 %v528, %v515
    %v646 = vpack.c.b16 %v529, %v516
    %v647 = vpack.c.b16 %v530, %v517
    %v648 = vpack.c.b16 %v531, %v518
    %v649 = vpack.c.b16 %v532, %v519
    %v650 = vpack.c.b16 %v533, %v520
    %v651 = vpack.c.b16 %v534, %v521
    %v652 = vpack.c.b16 %v535, %v522
    %v653 = vpack.c.b16 %v536, %v523
    %v654 = vpack.c.b16 %v537, %v524
    %v655 = vpack.c.b16 %v551, %v538
    %v656 = vpack.c.b16 %v552, %v539
    %v657 = vpack.c.b16 %v553, %v540
    %v658 = vpack.c.b16 %v554, %v541
    %v659 = vpack.c.b16 %v555, %v542
    %v660 = vpack.c.b16 %v556, %v543
    %v661 = vpack.c.b16 %v557, %v544
    %v662 = vpack.c.b16 %v558, %v545
    %v663 = vpack.c.b16 %v559, %v546
    %v664 = vpack.c.b16 %v560, %v547
    %v665 = vpack.c.b16 %v561, %v548
    %v666 = vpack.c.b16 %v562, %v549
    %v667 = vpack.c.b16 %v563, %v550
    %772 = vmatprep.subr.bf16.mxu0 %v656
    %773 = vmatpush1.bf16.msra.mxu0 %v655
    %774 = vmatprep.subr.bf16.mxu0 %v643
    %775 = vmatpush1.bf16.msra.mxu0 %v642
    %776 = vmatprep.subr.bf16.mxu0 %v630
    %777 = vmatpush1.bf16.msra.mxu0 %v629
    %778 = vmatprep.subr.bf16.mxu0 %v617
    %779 = vmatpush1.bf16.msra.mxu0 %v616
    %780 = vmatprep.subr.bf16.mxu0 %v604
    %781 = vmatpush1.bf16.msra.mxu0 %v603
    %782 = vmatprep.subr.bf16.mxu0 %v591
    %783 = vmatpush1.bf16.msra.mxu0 %v590
    %784 = vmatprep.subr.bf16.mxu0 %v578
    %785 = vmatpush1.bf16.msra.mxu0 %v577
    %786 = vmatprep.subr.bf16.mxu0 %v565
    %787 = vmatpush1.bf16.msra.mxu0 %v564
    %788 = vmatprep.subr.bf16.mxu0 0
    %789 = vmatpush2.bf16.msra.mxu0 0
    %790 = vmatprep.subr.bf16.mxu0 0
    %791 = vmatpush2.bf16.msra.mxu0 0
    %792 = vmatprep.subr.bf16.mxu0 0
    %793 = vmatpush2.bf16.msra.mxu0 0
    %794 = vmatprep.subr.bf16.mxu0 0
    %795 = vmatpush2.bf16.msra.mxu0 0
    %796 = vmatprep.subr.bf16.mxu0 0
    %797 = vmatpush2.bf16.msra.mxu0 0
    %798 = vmatprep.subr.bf16.mxu0 0
    %799 = vmatpush2.bf16.msra.mxu0 0
    %800 = vmatprep.subr.bf16.mxu0 0
    %801 = vmatpush2.bf16.msra.mxu0 0
    %802 = vmatprep.subr.bf16.mxu0 0
    %803 = vmatpush2.bf16.msra.mxu0 0
    %804 = vmatprep.mubr.bf16.mxu0 0
    %805 = vmatmul.mubr.bf16.gmra.mxu0 %v242
    %v806 = vpop.f32.mrf.mxu0
    %v807 = vadd.f32 %v176, %v806
    %v808 = vpop.f32.mrf.mxu0
    %v809 = vadd.f32 %v180, %v808
    %v810 = vpop.f32.mrf.mxu0
    %v811 = vadd.f32 %v176, %v810
    %v812 = vpop.f32.mrf.mxu0
    %v813 = vadd.f32 %v180, %v812
    %814 = vdwg.mxu0
    %815 = vmatprep.subr.bf16.mxu0 %v658
    %816 = vmatpush1.bf16.msra.mxu0 %v657
    %817 = vmatprep.subr.bf16.mxu0 %v645
    %818 = vmatpush1.bf16.msra.mxu0 %v644
    %819 = vmatprep.subr.bf16.mxu0 %v632
    %820 = vmatpush1.bf16.msra.mxu0 %v631
    %821 = vmatprep.subr.bf16.mxu0 %v619
    %822 = vmatpush1.bf16.msra.mxu0 %v618
    %823 = vmatprep.subr.bf16.mxu0 %v606
    %824 = vmatpush1.bf16.msra.mxu0 %v605
    %825 = vmatprep.subr.bf16.mxu0 %v593
    %826 = vmatpush1.bf16.msra.mxu0 %v592
    %827 = vmatprep.subr.bf16.mxu0 %v580
    %828 = vmatpush1.bf16.msra.mxu0 %v579
    %829 = vmatprep.subr.bf16.mxu0 %v567
    %830 = vmatpush1.bf16.msra.mxu0 %v566
    %831 = vmatprep.subr.bf16.mxu0 0
    %832 = vmatpush2.bf16.msra.mxu0 0
    %833 = vmatprep.subr.bf16.mxu0 0
    %834 = vmatpush2.bf16.msra.mxu0 0
    %835 = vmatprep.subr.bf16.mxu0 0
    %836 = vmatpush2.bf16.msra.mxu0 0
    %837 = vmatprep.subr.bf16.mxu0 0
    %838 = vmatpush2.bf16.msra.mxu0 0
    %839 = vmatprep.subr.bf16.mxu0 0
    %840 = vmatpush2.bf16.msra.mxu0 0
    %841 = vmatprep.subr.bf16.mxu0 0
    %842 = vmatpush2.bf16.msra.mxu0 0
    %843 = vmatprep.subr.bf16.mxu0 0
    %844 = vmatpush2.bf16.msra.mxu0 0
    %845 = vmatprep.subr.bf16.mxu0 0
    %846 = vmatpush2.bf16.msra.mxu0 0
    %847 = vmatprep.mubr.bf16.mxu0 0
    %848 = vmatmul.mubr.bf16.gmra.mxu0 %v242
    %v849 = vpop.f32.mrf.mxu0
    %v850 = vadd.f32 %v184, %v849
    %v851 = vpop.f32.mrf.mxu0
    %v852 = vadd.f32 %v188, %v851
    %v853 = vpop.f32.mrf.mxu0
    %v854 = vadd.f32 %v184, %v853
    %v855 = vpop.f32.mrf.mxu0
    %v856 = vadd.f32 %v188, %v855
    %857 = vdwg.mxu0
    %858 = vmatprep.subr.bf16.mxu0 %v660
    %859 = vmatpush1.bf16.msra.mxu0 %v659
    %860 = vmatprep.subr.bf16.mxu0 %v647
    %861 = vmatpush1.bf16.msra.mxu0 %v646
    %862 = vmatprep.subr.bf16.mxu0 %v634
    %863 = vmatpush1.bf16.msra.mxu0 %v633
    %864 = vmatprep.subr.bf16.mxu0 %v621
    %865 = vmatpush1.bf16.msra.mxu0 %v620
    %866 = vmatprep.subr.bf16.mxu0 %v608
    %867 = vmatpush1.bf16.msra.mxu0 %v607
    %868 = vmatprep.subr.bf16.mxu0 %v595
    %869 = vmatpush1.bf16.msra.mxu0 %v594
    %870 = vmatprep.subr.bf16.mxu0 %v582
    %871 = vmatpush1.bf16.msra.mxu0 %v581
    %872 = vmatprep.subr.bf16.mxu0 %v569
    %873 = vmatpush1.bf16.msra.mxu0 %v568
    %874 = vmatprep.subr.bf16.mxu0 0
    %875 = vmatpush2.bf16.msra.mxu0 0
    %876 = vmatprep.subr.bf16.mxu0 0
    %877 = vmatpush2.bf16.msra.mxu0 0
    %878 = vmatprep.subr.bf16.mxu0 0
    %879 = vmatpush2.bf16.msra.mxu0 0
    %880 = vmatprep.subr.bf16.mxu0 0
    %881 = vmatpush2.bf16.msra.mxu0 0
    %882 = vmatprep.subr.bf16.mxu0 0
    %883 = vmatpush2.bf16.msra.mxu0 0
    %884 = vmatprep.subr.bf16.mxu0 0
    %885 = vmatpush2.bf16.msra.mxu0 0
    %886 = vmatprep.subr.bf16.mxu0 0
    %887 = vmatpush2.bf16.msra.mxu0 0
    %888 = vmatprep.subr.bf16.mxu0 0
    %889 = vmatpush2.bf16.msra.mxu0 0
    %890 = vmatprep.mubr.bf16.mxu0 0
    %891 = vmatmul.mubr.bf16.gmra.mxu0 %v242
    %v892 = vpop.f32.mrf.mxu0
    %v893 = vadd.f32 %v192, %v892
    %v894 = vpop.f32.mrf.mxu0
    %v895 = vadd.f32 %v196, %v894
    %v896 = vpop.f32.mrf.mxu0
    %v897 = vadd.f32 %v192, %v896
    %v898 = vpop.f32.mrf.mxu0
    %v899 = vadd.f32 %v196, %v898
    %900 = vdwg.mxu0
    %901 = vmatprep.subr.bf16.mxu0 %v662
    %902 = vmatpush1.bf16.msra.mxu0 %v661
    %903 = vmatprep.subr.bf16.mxu0 %v649
    %904 = vmatpush1.bf16.msra.mxu0 %v648
    %905 = vmatprep.subr.bf16.mxu0 %v636
    %906 = vmatpush1.bf16.msra.mxu0 %v635
    %907 = vmatprep.subr.bf16.mxu0 %v623
    %908 = vmatpush1.bf16.msra.mxu0 %v622
    %909 = vmatprep.subr.bf16.mxu0 %v610
    %910 = vmatpush1.bf16.msra.mxu0 %v609
    %911 = vmatprep.subr.bf16.mxu0 %v597
    %912 = vmatpush1.bf16.msra.mxu0 %v596
    %913 = vmatprep.subr.bf16.mxu0 %v584
    %914 = vmatpush1.bf16.msra.mxu0 %v583
    %915 = vmatprep.subr.bf16.mxu0 %v571
    %916 = vmatpush1.bf16.msra.mxu0 %v570
    %917 = vmatprep.subr.bf16.mxu0 0
    %918 = vmatpush2.bf16.msra.mxu0 0
    %919 = vmatprep.subr.bf16.mxu0 0
    %920 = vmatpush2.bf16.msra.mxu0 0
    %921 = vmatprep.subr.bf16.mxu0 0
    %922 = vmatpush2.bf16.msra.mxu0 0
    %923 = vmatprep.subr.bf16.mxu0 0
    %924 = vmatpush2.bf16.msra.mxu0 0
    %925 = vmatprep.subr.bf16.mxu0 0
    %926 = vmatpush2.bf16.msra.mxu0 0
    %927 = vmatprep.subr.bf16.mxu0 0
    %928 = vmatpush2.bf16.msra.mxu0 0
    %929 = vmatprep.subr.bf16.mxu0 0
    %930 = vmatpush2.bf16.msra.mxu0 0
    %931 = vmatprep.subr.bf16.mxu0 0
    %932 = vmatpush2.bf16.msra.mxu0 0
    %933 = vmatprep.mubr.bf16.mxu0 0
    %934 = vmatmul.mubr.bf16.gmra.mxu0 %v242
    %v935 = vpop.f32.mrf.mxu0
    %v936 = vadd.f32 %v200, %v935
    %v937 = vpop.f32.mrf.mxu0
    %v938 = vadd.f32 %v204, %v937
    %v939 = vpop.f32.mrf.mxu0
    %v940 = vadd.f32 %v200, %v939
    %v941 = vpop.f32.mrf.mxu0
    %v942 = vadd.f32 %v204, %v941
    %943 = vdwg.mxu0
    %944 = vmatprep.subr.bf16.mxu0 %v664
    %945 = vmatpush1.bf16.msra.mxu0 %v663
    %946 = vmatprep.subr.bf16.mxu0 %v651
    %947 = vmatpush1.bf16.msra.mxu0 %v650
    %948 = vmatprep.subr.bf16.mxu0 %v638
    %949 = vmatpush1.bf16.msra.mxu0 %v637
    %950 = vmatprep.subr.bf16.mxu0 %v625
    %951 = vmatpush1.bf16.msra.mxu0 %v624
    %952 = vmatprep.subr.bf16.mxu0 %v612
    %953 = vmatpush1.bf16.msra.mxu0 %v611
    %954 = vmatprep.subr.bf16.mxu0 %v599
    %955 = vmatpush1.bf16.msra.mxu0 %v598
    %956 = vmatprep.subr.bf16.mxu0 %v586
    %957 = vmatpush1.bf16.msra.mxu0 %v585
    %958 = vmatprep.subr.bf16.mxu0 %v573
    %959 = vmatpush1.bf16.msra.mxu0 %v572
    %960 = vmatprep.subr.bf16.mxu0 0
    %961 = vmatpush2.bf16.msra.mxu0 0
    %962 = vmatprep.subr.bf16.mxu0 0
    %963 = vmatpush2.bf16.msra.mxu0 0
    %964 = vmatprep.subr.bf16.mxu0 0
    %965 = vmatpush2.bf16.msra.mxu0 0
    %966 = vmatprep.subr.bf16.mxu0 0
    %967 = vmatpush2.bf16.msra.mxu0 0
    %968 = vmatprep.subr.bf16.mxu0 0
    %969 = vmatpush2.bf16.msra.mxu0 0
    %970 = vmatprep.subr.bf16.mxu0 0
    %971 = vmatpush2.bf16.msra.mxu0 0
    %972 = vmatprep.subr.bf16.mxu0 0
    %973 = vmatpush2.bf16.msra.mxu0 0
    %974 = vmatprep.subr.bf16.mxu0 0
    %975 = vmatpush2.bf16.msra.mxu0 0
    %976 = vmatprep.mubr.bf16.mxu0 0
    %977 = vmatmul.mubr.bf16.gmra.mxu0 %v242
    %v978 = vpop.f32.mrf.mxu0
    %v979 = vadd.f32 %v208, %v978
    %v980 = vpop.f32.mrf.mxu0
    %v981 = vadd.f32 %v212, %v980
    %v982 = vpop.f32.mrf.mxu0
    %v983 = vadd.f32 %v208, %v982
    %v984 = vpop.f32.mrf.mxu0
    %v985 = vadd.f32 %v212, %v984
    %986 = vdwg.mxu0
    %987 = vmatprep.subr.bf16.mxu0 %v666
    %988 = vmatpush1.bf16.msra.mxu0 %v665
    %989 = vmatprep.subr.bf16.mxu0 %v653
    %990 = vmatpush1.bf16.msra.mxu0 %v652
    %991 = vmatprep.subr.bf16.mxu0 %v640
    %992 = vmatpush1.bf16.msra.mxu0 %v639
    %993 = vmatprep.subr.bf16.mxu0 %v627
    %994 = vmatpush1.bf16.msra.mxu0 %v626
    %995 = vmatprep.subr.bf16.mxu0 %v614
    %996 = vmatpush1.bf16.msra.mxu0 %v613
    %997 = vmatprep.subr.bf16.mxu0 %v601
    %998 = vmatpush1.bf16.msra.mxu0 %v600
    %999 = vmatprep.subr.bf16.mxu0 %v588
    %1000 = vmatpush1.bf16.msra.mxu0 %v587
    %1001 = vmatprep.subr.bf16.mxu0 %v575
    %1002 = vmatpush1.bf16.msra.mxu0 %v574
    %1003 = vmatprep.subr.bf16.mxu0 0
    %1004 = vmatpush2.bf16.msra.mxu0 0
    %1005 = vmatprep.subr.bf16.mxu0 0
    %1006 = vmatpush2.bf16.msra.mxu0 0
    %1007 = vmatprep.subr.bf16.mxu0 0
    %1008 = vmatpush2.bf16.msra.mxu0 0
    %1009 = vmatprep.subr.bf16.mxu0 0
    %1010 = vmatpush2.bf16.msra.mxu0 0
    %1011 = vmatprep.subr.bf16.mxu0 0
    %1012 = vmatpush2.bf16.msra.mxu0 0
    %1013 = vmatprep.subr.bf16.mxu0 0
    %1014 = vmatpush2.bf16.msra.mxu0 0
    %1015 = vmatprep.subr.bf16.mxu0 0
    %1016 = vmatpush2.bf16.msra.mxu0 0
    %1017 = vmatprep.subr.bf16.mxu0 0
    %1018 = vmatpush2.bf16.msra.mxu0 0
    %1019 = vmatprep.mubr.bf16.mxu0 0
    %1020 = vmatmul.mubr.bf16.gmra.mxu0 %v242
    %v1021 = vpop.f32.mrf.mxu0
    %v1022 = vadd.f32 %v216, %v1021
    %v1023 = vpop.f32.mrf.mxu0
    %v1024 = vadd.f32 %v220, %v1023
    %v1025 = vpop.f32.mrf.mxu0
    %v1026 = vadd.f32 %v216, %v1025
    %v1027 = vpop.f32.mrf.mxu0
    %v1028 = vadd.f32 %v220, %v1027
    %1029 = vdwg.mxu0
    %1030 = vmatprep.subr.bf16.mxu0 0
    %1031 = vmatpush1.bf16.msra.mxu0 %v667
    %1032 = vmatprep.subr.bf16.mxu0 0
    %1033 = vmatpush1.bf16.msra.mxu0 %v654
    %1034 = vmatprep.subr.bf16.mxu0 0
    %1035 = vmatpush1.bf16.msra.mxu0 %v641
    %1036 = vmatprep.subr.bf16.mxu0 0
    %1037 = vmatpush1.bf16.msra.mxu0 %v628
    %1038 = vmatprep.subr.bf16.mxu0 0
    %1039 = vmatpush1.bf16.msra.mxu0 %v615
    %1040 = vmatprep.subr.bf16.mxu0 0
    %1041 = vmatpush1.bf16.msra.mxu0 %v602
    %1042 = vmatprep.subr.bf16.mxu0 0
    %1043 = vmatpush1.bf16.msra.mxu0 %v589
    %1044 = vmatprep.subr.bf16.mxu0 0
    %1045 = vmatpush1.bf16.msra.mxu0 %v576
    %1046 = vmatprep.subr.bf16.mxu0 0
    %1047 = vmatpush2.bf16.msra.mxu0 0
    %1048 = vmatprep.subr.bf16.mxu0 0
    %1049 = vmatpush2.bf16.msra.mxu0 0
    %1050 = vmatprep.subr.bf16.mxu0 0
    %1051 = vmatpush2.bf16.msra.mxu0 0
    %1052 = vmatprep.subr.bf16.mxu0 0
    %1053 = vmatpush2.bf16.msra.mxu0 0
    %1054 = vmatprep.subr.bf16.mxu0 0
    %1055 = vmatpush2.bf16.msra.mxu0 0
    %1056 = vmatprep.subr.bf16.mxu0 0
    %1057 = vmatpush2.bf16.msra.mxu0 0
    %1058 = vmatprep.subr.bf16.mxu0 0
    %1059 = vmatpush2.bf16.msra.mxu0 0
    %1060 = vmatprep.subr.bf16.mxu0 0
    %1061 = vmatpush2.bf16.msra.mxu0 0
    %1062 = vmatprep.mubr.bf16.mxu0 0
    %1063 = vmatmul.mubr.bf16.gmra.mxu0 %v242
    %v1064 = vpop.f32.mrf.mxu0
    %v1065 = vadd.f32 %v224, %v1064
    %v1066 = vpop.f32.mrf.mxu0
    %v1067 = vpop.f32.mrf.mxu0
    %v1068 = vadd.f32 %v224, %v1067
    %v1069 = vpop.f32.mrf.mxu0
    %1070 = vdwg.mxu0
    %v1071 = vmax.f32 %v807, 0.0
    %v1072 = vmax.f32 %v809, 0.0
    %v1073 = vmax.f32 %v850, 0.0
    %v1074 = vmax.f32 %v852, 0.0
    %v1075 = vmax.f32 %v893, 0.0
    %v1076 = vmax.f32 %v895, 0.0
    %v1077 = vmax.f32 %v936, 0.0
    %v1078 = vmax.f32 %v938, 0.0
    %v1079 = vmax.f32 %v979, 0.0
    %v1080 = vmax.f32 %v981, 0.0
    %v1081 = vmax.f32 %v1022, 0.0
    %v1082 = vmax.f32 %v1024, 0.0
    %v1083 = vmax.f32 %v1065, 0.0
    %v1084 = vmax.f32 %v811, 0.0
    %v1085 = vmax.f32 %v813, 0.0
    %v1086 = vmax.f32 %v854, 0.0
    %v1087 = vmax.f32 %v856, 0.0
    %v1088 = vmax.f32 %v897, 0.0
    %v1089 = vmax.f32 %v899, 0.0
    %v1090 = vmax.f32 %v940, 0.0
    %v1091 = vmax.f32 %v942, 0.0
    %v1092 = vmax.f32 %v983, 0.0
    %v1093 = vmax.f32 %v985, 0.0
    %v1094 = vmax.f32 %v1026, 0.0
    %v1095 = vmax.f32 %v1028, 0.0
    %v1096 = vmax.f32 %v1068, 0.0
    %v1097 = vrot.slane %v1071, 4
    %v1098 = vmax.f32 %v1071, %v1097
    %v1099 = vrot.slane %v1098, 2
    %v1100 = vmax.f32 %v1098, %v1099
    %v1101 = vrot.slane %v1100, 1
    %v1102 = vmax.f32 %v1100, %v1101
    %v1103 = vrot.slane %v1072, 4
    %v1104 = vmax.f32 %v1072, %v1103
    %v1105 = vrot.slane %v1104, 2
    %v1106 = vmax.f32 %v1104, %v1105
    %v1107 = vrot.slane %v1106, 1
    %v1108 = vmax.f32 %v1106, %v1107
    %v1109 = vrot.slane %v1073, 4
    %v1110 = vmax.f32 %v1073, %v1109
    %v1111 = vrot.slane %v1110, 2
    %v1112 = vmax.f32 %v1110, %v1111
    %v1113 = vrot.slane %v1112, 1
    %v1114 = vmax.f32 %v1112, %v1113
    %v1115 = vrot.slane %v1074, 4
    %v1116 = vmax.f32 %v1074, %v1115
    %v1117 = vrot.slane %v1116, 2
    %v1118 = vmax.f32 %v1116, %v1117
    %v1119 = vrot.slane %v1118, 1
    %v1120 = vmax.f32 %v1118, %v1119
    %v1121 = vrot.slane %v1075, 4
    %v1122 = vmax.f32 %v1075, %v1121
    %v1123 = vrot.slane %v1122, 2
    %v1124 = vmax.f32 %v1122, %v1123
    %v1125 = vrot.slane %v1124, 1
    %v1126 = vmax.f32 %v1124, %v1125
    %v1127 = vrot.slane %v1076, 4
    %v1128 = vmax.f32 %v1076, %v1127
    %v1129 = vrot.slane %v1128, 2
    %v1130 = vmax.f32 %v1128, %v1129
    %v1131 = vrot.slane %v1130, 1
    %v1132 = vmax.f32 %v1130, %v1131
    %v1133 = vrot.slane %v1077, 4
    %v1134 = vmax.f32 %v1077, %v1133
    %v1135 = vrot.slane %v1134, 2
    %v1136 = vmax.f32 %v1134, %v1135
    %v1137 = vrot.slane %v1136, 1
    %v1138 = vmax.f32 %v1136, %v1137
    %v1139 = vrot.slane %v1078, 4
    %v1140 = vmax.f32 %v1078, %v1139
    %v1141 = vrot.slane %v1140, 2
    %v1142 = vmax.f32 %v1140, %v1141
    %v1143 = vrot.slane %v1142, 1
    %v1144 = vmax.f32 %v1142, %v1143
    %v1145 = vrot.slane %v1079, 4
    %v1146 = vmax.f32 %v1079, %v1145
    %v1147 = vrot.slane %v1146, 2
    %v1148 = vmax.f32 %v1146, %v1147
    %v1149 = vrot.slane %v1148, 1
    %v1150 = vmax.f32 %v1148, %v1149
    %v1151 = vrot.slane %v1080, 4
    %v1152 = vmax.f32 %v1080, %v1151
    %v1153 = vrot.slane %v1152, 2
    %v1154 = vmax.f32 %v1152, %v1153
    %v1155 = vrot.slane %v1154, 1
    %v1156 = vmax.f32 %v1154, %v1155
    %v1157 = vrot.slane %v1081, 4
    %v1158 = vmax.f32 %v1081, %v1157
    %v1159 = vrot.slane %v1158, 2
    %v1160 = vmax.f32 %v1158, %v1159
    %v1161 = vrot.slane %v1160, 1
    %v1162 = vmax.f32 %v1160, %v1161
    %v1163 = vrot.slane %v1082, 4
    %v1164 = vmax.f32 %v1082, %v1163
    %v1165 = vrot.slane %v1164, 2
    %v1166 = vmax.f32 %v1164, %v1165
    %v1167 = vrot.slane %v1166, 1
    %v1168 = vmax.f32 %v1166, %v1167
    %v1169 = vrot.slane %v1083, 4
    %v1170 = vmax.f32 %v1083, %v1169
    %v1171 = vrot.slane %v1170, 2
    %v1172 = vmax.f32 %v1170, %v1171
    %v1173 = vrot.slane %v1172, 1
    %v1174 = vmax.f32 %v1172, %v1173
    %v1175 = vrot.slane %v1084, 4
    %v1176 = vmax.f32 %v1084, %v1175
    %v1177 = vrot.slane %v1176, 2
    %v1178 = vmax.f32 %v1176, %v1177
    %v1179 = vrot.slane %v1178, 1
    %v1180 = vmax.f32 %v1178, %v1179
    %v1181 = vrot.slane %v1085, 4
    %v1182 = vmax.f32 %v1085, %v1181
    %v1183 = vrot.slane %v1182, 2
    %v1184 = vmax.f32 %v1182, %v1183
    %v1185 = vrot.slane %v1184, 1
    %v1186 = vmax.f32 %v1184, %v1185
    %v1187 = vrot.slane %v1086, 4
    %v1188 = vmax.f32 %v1086, %v1187
    %v1189 = vrot.slane %v1188, 2
    %v1190 = vmax.f32 %v1188, %v1189
    %v1191 = vrot.slane %v1190, 1
    %v1192 = vmax.f32 %v1190, %v1191
    %v1193 = vrot.slane %v1087, 4
    %v1194 = vmax.f32 %v1087, %v1193
    %v1195 = vrot.slane %v1194, 2
    %v1196 = vmax.f32 %v1194, %v1195
    %v1197 = vrot.slane %v1196, 1
    %v1198 = vmax.f32 %v1196, %v1197
    %v1199 = vrot.slane %v1088, 4
    %v1200 = vmax.f32 %v1088, %v1199
    %v1201 = vrot.slane %v1200, 2
    %v1202 = vmax.f32 %v1200, %v1201
    %v1203 = vrot.slane %v1202, 1
    %v1204 = vmax.f32 %v1202, %v1203
    %v1205 = vrot.slane %v1089, 4
    %v1206 = vmax.f32 %v1089, %v1205
    %v1207 = vrot.slane %v1206, 2
    %v1208 = vmax.f32 %v1206, %v1207
    %v1209 = vrot.slane %v1208, 1
    %v1210 = vmax.f32 %v1208, %v1209
    %v1211 = vrot.slane %v1090, 4
    %v1212 = vmax.f32 %v1090, %v1211
    %v1213 = vrot.slane %v1212, 2
    %v1214 = vmax.f32 %v1212, %v1213
    %v1215 = vrot.slane %v1214, 1
    %v1216 = vmax.f32 %v1214, %v1215
    %v1217 = vrot.slane %v1091, 4
    %v1218 = vmax.f32 %v1091, %v1217
    %v1219 = vrot.slane %v1218, 2
    %v1220 = vmax.f32 %v1218, %v1219
    %v1221 = vrot.slane %v1220, 1
    %v1222 = vmax.f32 %v1220, %v1221
    %v1223 = vrot.slane %v1092, 4
    %v1224 = vmax.f32 %v1092, %v1223
    %v1225 = vrot.slane %v1224, 2
    %v1226 = vmax.f32 %v1224, %v1225
    %v1227 = vrot.slane %v1226, 1
    %v1228 = vmax.f32 %v1226, %v1227
    %v1229 = vrot.slane %v1093, 4
    %v1230 = vmax.f32 %v1093, %v1229
    %v1231 = vrot.slane %v1230, 2
    %v1232 = vmax.f32 %v1230, %v1231
    %v1233 = vrot.slane %v1232, 1
    %v1234 = vmax.f32 %v1232, %v1233
    %v1235 = vrot.slane %v1094, 4
    %v1236 = vmax.f32 %v1094, %v1235
    %v1237 = vrot.slane %v1236, 2
    %v1238 = vmax.f32 %v1236, %v1237
    %v1239 = vrot.slane %v1238, 1
    %v1240 = vmax.f32 %v1238, %v1239
    %v1241 = vrot.slane %v1095, 4
    %v1242 = vmax.f32 %v1095, %v1241
    %v1243 = vrot.slane %v1242, 2
    %v1244 = vmax.f32 %v1242, %v1243
    %v1245 = vrot.slane %v1244, 1
    %v1246 = vmax.f32 %v1244, %v1245
    %v1247 = vrot.slane %v1096, 4
    %v1248 = vmax.f32 %v1096, %v1247
    %v1249 = vrot.slane %v1248, 2
    %v1250 = vmax.f32 %v1248, %v1249
    %v1251 = vrot.slane %v1250, 1
    %v1252 = vmax.f32 %v1250, %v1251
    %v1253 = vlaneseq
    %v1254 = vand.u32 %v1253, 127
    %vm1257 = vcmask 1041409
    %v1258 = vsel %vm1257, %v1180, %v1102
    %vm1260 = vcmask 787456
    %v1261 = vsel %vm1260, %v1258, -inf
    %1262 = vmax.xlane.f32.xlu0 %v1261
    %v1263 = vpop.xlane.xlu0 %1262
    %vm1264 = vcmp.eq.s32.totalorder %v1254, 0
    %v1265 = vsel %vm1264, %v1263, 0.0
    %v1268 = vsel %vm1257, %v1186, %v1108
    %vm1270 = vcmask 1042184
    %v1271 = vsel %vm1270, %v1258, -inf
    %vm1272 = vcmask 533504
    %v1273 = vsel %vm1272, %v1268, -inf
    %v1274 = vmax.f32 %v1271, %v1273
    %1275 = vmax.xlane.f32.xlu0 %v1274
    %v1276 = vpop.xlane.xlu0 %1275
    %vm1277 = vcmp.eq.s32.totalorder %v1254, 1
    %v1278 = vsel %vm1277, %v1276, %v1265
    %v1281 = vsel %vm1257, %v1192, %v1114
    %vm1283 = vcmask 1041936
    %v1284 = vsel %vm1283, %v1268, -inf
    %vm1285 = vcmask 279552
    %v1286 = vsel %vm1285, %v1281, -inf
    %v1287 = vmax.f32 %v1284, %v1286
    %1288 = vmax.xlane.f32.xlu0 %v1287
    %v1289 = vpop.xlane.xlu0 %1288
    %vm1290 = vcmp.eq.s32.totalorder %v1254, 2
    %v1291 = vsel %vm1290, %v1289, %v1278
    %v1294 = vsel %vm1257, %v1198, %v1120
    %vm1296 = vcmask 1041688
    %v1297 = vsel %vm1296, %v1281, -inf
    %vm1298 = vcmask 25600
    %v1299 = vsel %vm1298, %v1294, -inf
    %v1300 = vmax.f32 %v1297, %v1299
    %1301 = vmax.xlane.f32.xlu0 %v1300
    %v1302 = vpop.xlane.xlu0 %1301
    %vm1303 = vcmp.eq.s32.totalorder %v1254, 3
    %v1304 = vsel %vm1303, %v1302, %v1291
    %vm1305 = vcmask 820256
    %v1306 = vsel %vm1305, %v1294, -inf
    %1307 = vmax.xlane.f32.xlu0 %v1306
    %v1308 = vpop.xlane.xlu0 %1307
    %vm1309 = vcmp.eq.s32.totalorder %v1254, 4
    %v1310 = vsel %vm1309, %v1308, %v1304
    %v1313 = vsel %vm1257, %v1204, %v1126
    %vm1315 = vcmask 1042216
    %v1316 = vsel %vm1315, %v1294, -inf
    %vm1317 = vcmask 566272
    %v1318 = vsel %vm1317, %v1313, -inf
    %v1319 = vmax.f32 %v1316, %v1318
    %1320 = vmax.xlane.f32.xlu0 %v1319
    %v1321 = vpop.xlane.xlu0 %1320
    %vm1322 = vcmp.eq.s32.totalorder %v1254, 5
    %v1323 = vsel %vm1322, %v1321, %v1310
    %v1326 = vsel %vm1257, %v1210, %v1132
    %vm1328 = vcmask 1041968
    %v1329 = vsel %vm1328, %v1313, -inf
    %vm1330 = vcmask 312320
    %v1331 = vsel %vm1330, %v1326, -inf
    %v1332 = vmax.f32 %v1329, %v1331
    %1333 = vmax.xlane.f32.xlu0 %v1332
    %v1334 = vpop.xlane.xlu0 %1333
    %vm1335 = vcmp.eq.s32.totalorder %v1254, 6
    %v1336 = vsel %vm1335, %v1334, %v1323
    %v1339 = vsel %vm1257, %v1216, %v1138
    %vm1341 = vcmask 1041720
    %v1342 = vsel %vm1341, %v1326, -inf
    %vm1343 = vcmask 58368
    %v1344 = vsel %vm1343, %v1339, -inf
    %v1345 = vmax.f32 %v1342, %v1344
    %1346 = vmax.xlane.f32.xlu0 %v1345
    %v1347 = vpop.xlane.xlu0 %1346
    %vm1348 = vcmp.eq.s32.totalorder %v1254, 7
    %v1349 = vsel %vm1348, %v1347, %v1336
    %v1352 = vsel %vm1257, %v1222, %v1144
    %vm1354 = vcmask 525312
    %v1355 = vsel %vm1354, %v1352, -inf
    %1356 = vmax.xlane.f32.xlu0 %v1355
    %v1357 = vpop.xlane.xlu0 %1356
    %vm1358 = vcmp.eq.s32.totalorder %v1254, 8
    %v1359 = vsel %vm1358, %v1357, %v1349
    %v1362 = vsel %vm1257, %v1228, %v1150
    %vm1364 = vcmask 1041928
    %v1365 = vsel %vm1364, %v1352, -inf
    %vm1366 = vcmask 9216
    %v1367 = vsel %vm1366, %v1362, -inf
    %v1368 = vmax.f32 %v1365, %v1367
    %1369 = vmax.xlane.f32.xlu0 %v1368
    %v1370 = vpop.xlane.xlu0 %1369
    %vm1371 = vcmp.eq.s32.totalorder %v1254, 9
    %v1372 = vsel %vm1371, %v1370, %v1359
    %vm1373 = vcmask 541712
    %v1374 = vsel %vm1373, %v1362, -inf
    %1375 = vmax.xlane.f32.xlu0 %v1374
    %v1376 = vpop.xlane.xlu0 %1375
    %vm1377 = vcmp.eq.s32.totalorder %v1254, 10
    %v1378 = vsel %vm1377, %v1376, %v1372
    %v1381 = vsel %vm1257, %v1234, %v1156
    %vm1383 = vcmask 1041944
    %v1384 = vsel %vm1383, %v1362, -inf
    %v1385 = vsel %vm1298, %v1381, -inf
    %v1386 = vmax.f32 %v1384, %v1385
    %1387 = vmax.xlane.f32.xlu0 %v1386
    %v1388 = vpop.xlane.xlu0 %1387
    %vm1389 = vcmp.eq.s32.totalorder %v1254, 11
    %v1390 = vsel %vm1389, %v1388, %v1378
    %vm1391 = vcmask 558112
    %v1392 = vsel %vm1391, %v1381, -inf
    %1393 = vmax.xlane.f32.xlu0 %v1392
    %v1394 = vpop.xlane.xlu0 %1393
    %vm1395 = vcmp.eq.s32.totalorder %v1254, 12
    %v1396 = vsel %vm1395, %v1394, %v1390
    %v1399 = vsel %vm1257, %v1240, %v1162
    %vm1401 = vcmask 1041960
    %v1402 = vsel %vm1401, %v1381, -inf
    %vm1403 = vcmask 41984
    %v1404 = vsel %vm1403, %v1399, -inf
    %v1405 = vmax.f32 %v1402, %v1404
    %1406 = vmax.xlane.f32.xlu0 %v1405
    %v1407 = vpop.xlane.xlu0 %1406
    %vm1408 = vcmp.eq.s32.totalorder %v1254, 13
    %v1409 = vsel %vm1408, %v1407, %v1396
    %vm1410 = vcmask 574512
    %v1411 = vsel %vm1410, %v1399, -inf
    %1412 = vmax.xlane.f32.xlu0 %v1411
    %v1413 = vpop.xlane.xlu0 %1412
    %vm1414 = vcmp.eq.s32.totalorder %v1254, 14
    %v1415 = vsel %vm1414, %v1413, %v1409
    %v1418 = vsel %vm1257, %v1246, %v1168
    %vm1420 = vcmask 1041976
    %v1421 = vsel %vm1420, %v1399, -inf
    %v1422 = vsel %vm1343, %v1418, -inf
    %v1423 = vmax.f32 %v1421, %v1422
    %1424 = vmax.xlane.f32.xlu0 %v1423
    %v1425 = vpop.xlane.xlu0 %1424
    %vm1426 = vcmp.eq.s32.totalorder %v1254, 15
    %v1427 = vsel %vm1426, %v1425, %v1415
    %vm1428 = vcmp.eq.s32.totalorder %v1254, 16
    %1430 = vset.pattern.permute.xlu0 0
    %1431 = vperm.xlu0 %1430, %v1174
    %v1432 = vpop.permute.xlu0 %1431
    %1434 = vset.pattern.permute.xlu0 0
    %1435 = vperm.xlu0 %1434, %v1252
    %v1436 = vpop.permute.xlu0 %1435
    %v1437 = vsel %vm1257, %v1436, %v1432
    %v1439 = vsel %vm1428, %v1437, %v1427
    %vm1440 = vcmp.eq.s32.totalorder %v1254, 17
    %1441 = vset.pattern.permute.xlu0 1
    %1442 = vperm.xlu0 %1441, %v1174
    %v1443 = vpop.permute.xlu0 %1442
    %1444 = vset.pattern.permute.xlu0 1
    %1445 = vperm.xlu0 %1444, %v1252
    %v1446 = vpop.permute.xlu0 %1445
    %v1447 = vsel %vm1257, %v1446, %v1443
    %v1449 = vsel %vm1440, %v1447, %v1439
    %vm1450 = vcmp.eq.s32.totalorder %v1254, 18
    %1451 = vset.pattern.permute.xlu0 2
    %1452 = vperm.xlu0 %1451, %v1174
    %v1453 = vpop.permute.xlu0 %1452
    %1454 = vset.pattern.permute.xlu0 2
    %1455 = vperm.xlu0 %1454, %v1252
    %v1456 = vpop.permute.xlu0 %1455
    %v1457 = vsel %vm1257, %v1456, %v1453
    %v1459 = vsel %vm1450, %v1457, %v1449
    %vm1460 = vcmp.eq.s32.totalorder %v1254, 19
    %1461 = vset.pattern.permute.xlu0 3
    %1462 = vperm.xlu0 %1461, %v1174
    %v1463 = vpop.permute.xlu0 %1462
    %1464 = vset.pattern.permute.xlu0 3
    %1465 = vperm.xlu0 %1464, %v1252
    %v1466 = vpop.permute.xlu0 %1465
    %v1467 = vsel %vm1257, %v1466, %v1463
    %v1469 = vsel %vm1460, %v1467, %v1459
    %vm1470 = vcmp.eq.s32.totalorder %v1254, 20
    %1471 = vset.pattern.permute.xlu0 4
    %1472 = vperm.xlu0 %1471, %v1174
    %v1473 = vpop.permute.xlu0 %1472
    %1474 = vset.pattern.permute.xlu0 4
    %1475 = vperm.xlu0 %1474, %v1252
    %v1476 = vpop.permute.xlu0 %1475
    %v1477 = vsel %vm1257, %v1476, %v1473
    %v1479 = vsel %vm1470, %v1477, %v1469
    %vm1480 = vcmp.eq.s32.totalorder %v1254, 21
    %1481 = vset.pattern.permute.xlu0 5
    %1482 = vperm.xlu0 %1481, %v1174
    %v1483 = vpop.permute.xlu0 %1482
    %1484 = vset.pattern.permute.xlu0 5
    %1485 = vperm.xlu0 %1484, %v1252
    %v1486 = vpop.permute.xlu0 %1485
    %v1487 = vsel %vm1257, %v1486, %v1483
    %v1489 = vsel %vm1480, %v1487, %v1479
    %vm1490 = vcmp.eq.s32.totalorder %v1254, 22
    %1491 = vset.pattern.permute.xlu0 6
    %1492 = vperm.xlu0 %1491, %v1174
    %v1493 = vpop.permute.xlu0 %1492
    %1494 = vset.pattern.permute.xlu0 6
    %1495 = vperm.xlu0 %1494, %v1252
    %v1496 = vpop.permute.xlu0 %1495
    %v1497 = vsel %vm1257, %v1496, %v1493
    %v1499 = vsel %vm1490, %v1497, %v1489
    %vm1500 = vcmp.eq.s32.totalorder %v1254, 23
    %1501 = vset.pattern.permute.xlu0 7
    %1502 = vperm.xlu0 %1501, %v1174
    %v1503 = vpop.permute.xlu0 %1502
    %1504 = vset.pattern.permute.xlu0 7
    %1505 = vperm.xlu0 %1504, %v1252
    %v1506 = vpop.permute.xlu0 %1505
    %v1507 = vsel %vm1257, %v1506, %v1503
    %v1509 = vsel %vm1500, %v1507, %v1499
    %1510 = vst [vmem:[#allocation8] sm:$0x3] %v1509
    // Predicated region
    $region26: #{tpu_custom_call.1} parent=1 // pred_check
      _
    $region27: #{tpu_custom_call.1} parent=1 // pred_check_branch
      %1512 = sbr.rel (0) target = $region29
    $region28: #{tpu_custom_call.1} parent=1 // pred_region
      %s1514 = ssub.s32 32, 32
      %1515 = vsyncadd [#allocation4], %s1514
      %s1517 = sshll.u32 [#allocation8], 4
      %s1518 = int_to_ptr.vmem [resolvable:$true] %s1517
      %1520 = dma.vmem_to_hbm [thread:$0]  %s1518, 32, %s3, [#allocation4]
    $region29: #{tpu_custom_call.1} parent=1 // pred_fallthru
      _
    // Predicated region
    $region30: #{tpu_custom_call.1} parent=1 // pred_check
      _
    $region31: #{tpu_custom_call.1} parent=1 // pred_check_branch
      %1522 = sbr.rel (0) target = $region33
    $region32: #{tpu_custom_call.1} parent=1 // pred_region
      %1523 = dma.done [#allocation4], 32
    $region33: #{tpu_custom_call.1} parent=1 // pred_fallthru
      _
    %1524 = vsyncpa [#allocation3], 1
    %1525 = vsyncpa [#allocation6], 1
    %1526 = vsyncpa [#allocation4], 1

</llo_original>
